<compile_context>
chip_gen: v5e
topology: v5e:2x2
jax: 0.10.0
libtpu: 0.0.40
codegen_flags: <defaults>
</compile_context>

<pallas_src>
import jax
import jax.numpy as jnp
from jax.experimental import pallas as pl
from jax.experimental.pallas import tpu as pltpu

LATENT = 100
Z_PAD = 128            # latent lane-padded to one full vreg width (inside VMEM)
H1 = 128
H2 = 256
H3 = 512
IMAGE_SIZE = 28 * 28   # 784


def _round_up(x, m):
    return ((x + m - 1) // m) * m


def _generator_kernel(z_ref, w1_ref, b1_ref, w2_ref, b2_ref, w3_ref, b3_ref,
                      w4_ref, b4_ref, o_ref, xz_ref):
    # One batch tile per grid step; weights are VMEM-resident across steps.
    # Lane-pad the latent (100 -> 128) inside VMEM: zero scratch + masked store.
    xz_ref[...] = jnp.zeros_like(xz_ref)
    xz_ref[:, :LATENT] = z_ref[...].astype(jnp.bfloat16)
    x = xz_ref[...]                                                       # (TB, 128) bf16

    h = jnp.dot(x, w1_ref[...], preferred_element_type=jnp.float32) + b1_ref[...]
    h = jnp.maximum(h, 0.0)                                               # ReLU

    h = jnp.dot(h.astype(jnp.bfloat16), w2_ref[...],
                preferred_element_type=jnp.float32) + b2_ref[...]
    h = jnp.maximum(h, 0.0)                                               # ReLU

    h = jnp.dot(h.astype(jnp.bfloat16), w3_ref[...],
                preferred_element_type=jnp.float32) + b3_ref[...]
    h = jnp.maximum(h, 0.0)                                               # ReLU

    h = jnp.dot(h.astype(jnp.bfloat16), w4_ref[...],
                preferred_element_type=jnp.float32) + b4_ref[...]
    # f32 tanh (portable across v5e/v6e/v7x), bf16 store (halves HBM writeback).
    o_ref[...] = jnp.tanh(h).astype(o_ref.dtype)                          # (TB, 784)


def init_params(key):
    """PyTorch-default Linear init; weights stored as (in, out) (transposed)."""
    ks = jax.random.split(key, 8)

    def linear(kw, kb, fan_in, fan_out):
        bound = 1.0 / (fan_in ** 0.5)
        w = jax.random.uniform(kw, (fan_in, fan_out), jnp.float32, -bound, bound)
        b = jax.random.uniform(kb, (1, fan_out), jnp.float32, -bound, bound)
        return w, b

    w1, b1 = linear(ks[0], ks[1], LATENT, H1)
    w2, b2 = linear(ks[2], ks[3], H1, H2)
    w3, b3 = linear(ks[4], ks[5], H2, H3)
    w4, b4 = linear(ks[6], ks[7], H3, IMAGE_SIZE)
    return (w1, b1, w2, b2, w3, b3, w4, b4)


def prepare_params(params):
    """One-time prep: cast weights to bf16; zero-pad W1's K dim 100 -> 128."""
    w1, b1, w2, b2, w3, b3, w4, b4 = params
    w1p = jnp.pad(w1, ((0, Z_PAD - LATENT), (0, 0))).astype(jnp.bfloat16)  # (128, 128)
    w2p = w2.astype(jnp.bfloat16)                                          # (128, 256)
    w3p = w3.astype(jnp.bfloat16)                                          # (256, 512)
    w4p = w4.astype(jnp.bfloat16)                                          # (512, 784)
    return (w1p, b1, w2p, b2, w3p, b3, w4p, b4)                            # biases f32


def generator_forward(z, prepared_params, *, tb=1024):
    """z: (B, 100) float32.  Returns generated images (B, 1, 28, 28) in bf16."""
    b = z.shape[0]
    w1, b1, w2, b2, w3, b3, w4, b4 = prepared_params

    # Balanced batch tiles (waste < 8 rows/tile); >= 2 tiles when B >= 16 so the
    # "parallel" grid axis can shard across v7x's two TensorCores.
    b_pad = _round_up(b, 8)
    n_tiles = max(2, pl.cdiv(b_pad, tb)) if b_pad >= 16 else 1
    tb_eff = _round_up(pl.cdiv(b_pad, n_tiles), 8)
    n_tiles = pl.cdiv(b_pad, tb_eff)

    # Row-only pad (no-op when B % 8 == 0); the 100->128 lane pad happens in VMEM.
    z_p = jnp.pad(z.astype(jnp.float32), ((0, b_pad - b), (0, 0)))

    weight_spec = lambda a: pl.BlockSpec(a.shape, lambda i: (0, 0))   # VMEM-resident
    in_specs = [
        pl.BlockSpec((tb_eff, LATENT), lambda i: (i, 0)),             # z tile streams
        weight_spec(w1), weight_spec(b1),
        weight_spec(w2), weight_spec(b2),
        weight_spec(w3), weight_spec(b3),
        weight_spec(w4), weight_spec(b4),
    ]
    out_specs = pl.BlockSpec((tb_eff, IMAGE_SIZE), lambda i: (i, 0))
    out_shape = jax.ShapeDtypeStruct((b_pad, IMAGE_SIZE), jnp.bfloat16)

    # Advisory cost estimate so XLA can schedule around this small call.
    flops = 2 * b_pad * (Z_PAD * H1 + H1 * H2 + H2 * H3 + H3 * IMAGE_SIZE)
    weight_bytes = 2 * (Z_PAD * H1 + H1 * H2 + H2 * H3 + H3 * IMAGE_SIZE)   # bf16
    bias_bytes = 4 * (H1 + H2 + H3 + IMAGE_SIZE)
    bytes_accessed = (b_pad * LATENT * 4) + (b_pad * IMAGE_SIZE * 2) + weight_bytes + bias_bytes
    cost = pl.CostEstimate(flops=flops, transcendentals=b_pad * IMAGE_SIZE,
                           bytes_accessed=bytes_accessed)

    # VMEM budget from the actual (lane-padded) tile footprint, with margin,
    # clamped below v7x's 64 MiB physical VMEM per TensorCore.
    out_lanes = _round_up(IMAGE_SIZE, 128)                                   # 896
    weight_vmem = 2 * weight_bytes + 2 * 4 * (H1 + H2 + H3 + out_lanes)      # double-buffered
    io_vmem = 2 * tb_eff * Z_PAD * 4 + 2 * tb_eff * out_lanes * 2            # z / out tiles
    act_vmem = tb_eff * (Z_PAD + H1 + H2 + H3 + out_lanes) * 6               # f32 + bf16 copies
    scratch_vmem = tb_eff * Z_PAD * 2
    vmem_limit = int(1.5 * (weight_vmem + io_vmem + act_vmem + scratch_vmem))
    vmem_limit = max(32 * 1024 * 1024, min(vmem_limit, 56 * 1024 * 1024))

    out = pl.pallas_call(
        _generator_kernel,
        out_shape=out_shape,
        grid_spec=pltpu.PrefetchScalarGridSpec(
            num_scalar_prefetch=0,
            grid=(n_tiles,),
            in_specs=in_specs,
            out_specs=out_specs,
            scratch_shapes=[pltpu.VMEM((tb_eff, Z_PAD), jnp.bfloat16)],
        ),
        compiler_params=pltpu.CompilerParams(
            dimension_semantics=("parallel",),
            vmem_limit_bytes=vmem_limit),
        cost_estimate=cost,
    )(z_p, w1, b1, w2, b2, w3, b3, w4, b4)

    # No lane crop needed; row slice is an identity when B % 8 == 0.
    # TODO(synk): downstream consumers (discriminator) receive bf16 images here;
    #             cast at the consumer if f32 is required.
    return out[:b].reshape(b, 1, 28, 28)


def _reference(z, prepared_params):
    """f32 reference using the same bf16-rounded weights."""
    w1, b1, w2, b2, w3, b3, w4, b4 = prepared_params
    x = jnp.pad(z.astype(jnp.float32), ((0, 0), (0, Z_PAD - LATENT)))
    h = jnp.maximum(x @ w1.astype(jnp.float32) + b1, 0.0)
    h = jnp.maximum(h @ w2.astype(jnp.float32) + b2, 0.0)
    h = jnp.maximum(h @ w3.astype(jnp.float32) + b3, 0.0)
    out = jnp.tanh(h @ w4.astype(jnp.float32) + b4)
    return out.reshape(z.shape[0], 1, 28, 28)


if __name__ == "__main__":
    key = jax.random.PRNGKey(0)
    k_z, k_par = jax.random.split(key)

    B = 2
    z = jax.random.normal(k_z, (B, LATENT), jnp.float32)
    params = init_params(k_par)
    prepared = prepare_params(params)

    img = generator_forward(z, prepared)
    img = jax.block_until_ready(img)

    ref = _reference(z, prepared)
    assert img.shape == (B, 1, 28, 28), img.shape
    img_f32 = img.astype(jnp.float32)
    max_err = float(jnp.max(jnp.abs(img_f32 - ref)))
    assert jnp.allclose(img_f32, ref, atol=5e-2, rtol=5e-2), max_err

    print("KERNEL_OK")
</pallas_src>

<mosaic_0001>
module attributes {stable_mosaic.version = 11 : i64} {
  func.func @_generator_kernel(%arg0: i32, %arg1: memref<8x100xf32, #tpu.memory_space<vmem>>, %arg2: memref<128x128xbf16, #tpu.memory_space<vmem>>, %arg3: memref<1x128xf32, #tpu.memory_space<vmem>>, %arg4: memref<128x256xbf16, #tpu.memory_space<vmem>>, %arg5: memref<1x256xf32, #tpu.memory_space<vmem>>, %arg6: memref<256x512xbf16, #tpu.memory_space<vmem>>, %arg7: memref<1x512xf32, #tpu.memory_space<vmem>>, %arg8: memref<512x784xbf16, #tpu.memory_space<vmem>>, %arg9: memref<1x784xf32, #tpu.memory_space<vmem>>, %arg10: memref<8x784xbf16, #tpu.memory_space<vmem>>, %arg11: memref<8x128xbf16, #tpu.memory_space<vmem>>) attributes {dimension_semantics = [#tpu.dimension_semantics<parallel>], iteration_bounds = array<i64: 1>, scalar_prefetch = 0 : i64, scratch_operands = 1 : i64, tpu.core_type = #tpu.core_type<tc>, window_params = [{transform_indices = @transform_0, window_bounds = array<i64: 8, 100>}, {pipeline_mode = #tpu.pipeline_mode<synchronous>, transform_indices = @transform_1, window_bounds = array<i64: 128, 128>}, {pipeline_mode = #tpu.pipeline_mode<synchronous>, transform_indices = @transform_2, window_bounds = array<i64: 1, 128>}, {pipeline_mode = #tpu.pipeline_mode<synchronous>, transform_indices = @transform_3, window_bounds = array<i64: 128, 256>}, {pipeline_mode = #tpu.pipeline_mode<synchronous>, transform_indices = @transform_4, window_bounds = array<i64: 1, 256>}, {pipeline_mode = #tpu.pipeline_mode<synchronous>, transform_indices = @transform_5, window_bounds = array<i64: 256, 512>}, {pipeline_mode = #tpu.pipeline_mode<synchronous>, transform_indices = @transform_6, window_bounds = array<i64: 1, 512>}, {pipeline_mode = #tpu.pipeline_mode<synchronous>, transform_indices = @transform_7, window_bounds = array<i64: 512, 784>}, {pipeline_mode = #tpu.pipeline_mode<synchronous>, transform_indices = @transform_8, window_bounds = array<i64: 1, 784>}, {transform_indices = @transform_9, window_bounds = array<i64: 8, 784>}]} {
    %cst = arith.constant 0.000000e+00 : bf16
    %0 = vector.broadcast %cst : bf16 to vector<8x128xbf16>
    %c0 = arith.constant 0 : index
    %c0_0 = arith.constant 0 : index
    %1 = vector.load %arg11[%c0, %c0_0] : memref<8x128xbf16, #tpu.memory_space<vmem>>, vector<8x128xbf16>
    tpu.vector_store %arg11[%c0, %c0_0], %0 {strides = array<i32>} : memref<8x128xbf16, #tpu.memory_space<vmem>>, vector<8x128xbf16>,
    %c0_1 = arith.constant 0 : index
    %c0_2 = arith.constant 0 : index
    %2 = vector.load %arg1[%c0_1, %c0_2] : memref<8x100xf32, #tpu.memory_space<vmem>>, vector<8x100xf32>
    %3 = arith.truncf %2 : vector<8x100xf32> to vector<8x100xbf16>
    %c0_3 = arith.constant 0 : index
    %c0_4 = arith.constant 0 : index
    %4 = vector.load %arg11[%c0_3, %c0_4] : memref<8x128xbf16, #tpu.memory_space<vmem>>, vector<8x100xbf16>
    tpu.vector_store %arg11[%c0_3, %c0_4], %3 {strides = array<i32>} : memref<8x128xbf16, #tpu.memory_space<vmem>>, vector<8x100xbf16>,
    %c0_5 = arith.constant 0 : index
    %c0_6 = arith.constant 0 : index
    %5 = vector.load %arg11[%c0_5, %c0_6] : memref<8x128xbf16, #tpu.memory_space<vmem>>, vector<8x128xbf16>
    %c0_7 = arith.constant 0 : index
    %c0_8 = arith.constant 0 : index
    %6 = vector.load %arg2[%c0_7, %c0_8] : memref<128x128xbf16, #tpu.memory_space<vmem>>, vector<128x128xbf16>
    %cst_9 = arith.constant dense<0.000000e+00> : vector<8x128xf32>
    %7 = tpu.matmul %5, %6, %cst_9 {dimension_numbers = #tpu.dot_dimension_numbers<[1], [0], [0], [1], [0, 0, 1, 1], [], []>} : vector<8x128xbf16>, vector<128x128xbf16>, vector<8x128xf32> -> vector<8x128xf32>
    %c0_10 = arith.constant 0 : index
    %c0_11 = arith.constant 0 : index
    %8 = vector.load %arg3[%c0_10, %c0_11] : memref<1x128xf32, #tpu.memory_space<vmem>>, vector<1x128xf32>
    %9 = vector.broadcast %8 : vector<1x128xf32> to vector<8x128xf32>
    %10 = arith.addf %7, %9 : vector<8x128xf32>
    %cst_12 = arith.constant 0.000000e+00 : f32
    %11 = vector.broadcast %cst_12 : f32 to vector<8x128xf32>
    %12 = arith.maximumf %10, %11 : vector<8x128xf32>
    %13 = arith.truncf %12 : vector<8x128xf32> to vector<8x128xbf16>
    %c0_13 = arith.constant 0 : index
    %c0_14 = arith.constant 0 : index
    %14 = vector.load %arg4[%c0_13, %c0_14] : memref<128x256xbf16, #tpu.memory_space<vmem>>, vector<128x256xbf16>
    %cst_15 = arith.constant dense<0.000000e+00> : vector<8x256xf32>
    %15 = tpu.matmul %13, %14, %cst_15 {dimension_numbers = #tpu.dot_dimension_numbers<[1], [0], [0], [1], [0, 0, 1, 1], [], []>} : vector<8x128xbf16>, vector<128x256xbf16>, vector<8x256xf32> -> vector<8x256xf32>
    %c0_16 = arith.constant 0 : index
    %c0_17 = arith.constant 0 : index
    %16 = vector.load %arg5[%c0_16, %c0_17] : memref<1x256xf32, #tpu.memory_space<vmem>>, vector<1x256xf32>
    %17 = vector.broadcast %16 : vector<1x256xf32> to vector<8x256xf32>
    %18 = arith.addf %15, %17 : vector<8x256xf32>
    %cst_18 = arith.constant 0.000000e+00 : f32
    %19 = vector.broadcast %cst_18 : f32 to vector<8x256xf32>
    %20 = arith.maximumf %18, %19 : vector<8x256xf32>
    %21 = arith.truncf %20 : vector<8x256xf32> to vector<8x256xbf16>
    %c0_19 = arith.constant 0 : index
    %c0_20 = arith.constant 0 : index
    %22 = vector.load %arg6[%c0_19, %c0_20] : memref<256x512xbf16, #tpu.memory_space<vmem>>, vector<256x512xbf16>
    %cst_21 = arith.constant dense<0.000000e+00> : vector<8x512xf32>
    %23 = tpu.matmul %21, %22, %cst_21 {dimension_numbers = #tpu.dot_dimension_numbers<[1], [0], [0], [1], [0, 0, 1, 1], [], []>} : vector<8x256xbf16>, vector<256x512xbf16>, vector<8x512xf32> -> vector<8x512xf32>
    %c0_22 = arith.constant 0 : index
    %c0_23 = arith.constant 0 : index
    %24 = vector.load %arg7[%c0_22, %c0_23] : memref<1x512xf32, #tpu.memory_space<vmem>>, vector<1x512xf32>
    %25 = vector.broadcast %24 : vector<1x512xf32> to vector<8x512xf32>
    %26 = arith.addf %23, %25 : vector<8x512xf32>
    %cst_24 = arith.constant 0.000000e+00 : f32
    %27 = vector.broadcast %cst_24 : f32 to vector<8x512xf32>
    %28 = arith.maximumf %26, %27 : vector<8x512xf32>
    %29 = arith.truncf %28 : vector<8x512xf32> to vector<8x512xbf16>
    %c0_25 = arith.constant 0 : index
    %c0_26 = arith.constant 0 : index
    %30 = vector.load %arg8[%c0_25, %c0_26] : memref<512x784xbf16, #tpu.memory_space<vmem>>, vector<512x784xbf16>
    %cst_27 = arith.constant dense<0.000000e+00> : vector<8x784xf32>
    %31 = tpu.matmul %29, %30, %cst_27 {dimension_numbers = #tpu.dot_dimension_numbers<[1], [0], [0], [1], [0, 0, 1, 1], [], []>} : vector<8x512xbf16>, vector<512x784xbf16>, vector<8x784xf32> -> vector<8x784xf32>
    %c0_28 = arith.constant 0 : index
    %c0_29 = arith.constant 0 : index
    %32 = vector.load %arg9[%c0_28, %c0_29] : memref<1x784xf32, #tpu.memory_space<vmem>>, vector<1x784xf32>
    %33 = vector.broadcast %32 : vector<1x784xf32> to vector<8x784xf32>
    %34 = arith.addf %31, %33 : vector<8x784xf32>
    %35 = math.tanh %34 : vector<8x784xf32>
    %36 = arith.truncf %35 : vector<8x784xf32> to vector<8x784xbf16>
    %c0_30 = arith.constant 0 : index
    %c0_31 = arith.constant 0 : index
    %37 = vector.load %arg10[%c0_30, %c0_31] : memref<8x784xbf16, #tpu.memory_space<vmem>>, vector<8x784xbf16>
    tpu.vector_store %arg10[%c0_30, %c0_31], %36 {strides = array<i32>} : memref<8x784xbf16, #tpu.memory_space<vmem>>, vector<8x784xbf16>,
    return
  }
  func.func @transform_0(%arg0: i32) -> (i32, i32) {
    %c0_i32 = arith.constant 0 : i32
    %c0_i32_0 = arith.constant 0 : i32
    return %arg0, %c0_i32 : i32, i32
  }
  func.func @transform_1(%arg0: i32) -> (i32, i32) {
    %c0_i32 = arith.constant 0 : i32
    %c0_i32_0 = arith.constant 0 : i32
    %c0_i32_1 = arith.constant 0 : i32
    return %c0_i32, %c0_i32_0 : i32, i32
  }
  func.func @transform_2(%arg0: i32) -> (i32, i32) {
    %c0_i32 = arith.constant 0 : i32
    %c0_i32_0 = arith.constant 0 : i32
    %c0_i32_1 = arith.constant 0 : i32
    return %c0_i32, %c0_i32_0 : i32, i32
  }
  func.func @transform_3(%arg0: i32) -> (i32, i32) {
    %c0_i32 = arith.constant 0 : i32
    %c0_i32_0 = arith.constant 0 : i32
    %c0_i32_1 = arith.constant 0 : i32
    return %c0_i32, %c0_i32_0 : i32, i32
  }
  func.func @transform_4(%arg0: i32) -> (i32, i32) {
    %c0_i32 = arith.constant 0 : i32
    %c0_i32_0 = arith.constant 0 : i32
    %c0_i32_1 = arith.constant 0 : i32
    return %c0_i32, %c0_i32_0 : i32, i32
  }
  func.func @transform_5(%arg0: i32) -> (i32, i32) {
    %c0_i32 = arith.constant 0 : i32
    %c0_i32_0 = arith.constant 0 : i32
    %c0_i32_1 = arith.constant 0 : i32
    return %c0_i32, %c0_i32_0 : i32, i32
  }
  func.func @transform_6(%arg0: i32) -> (i32, i32) {
    %c0_i32 = arith.constant 0 : i32
    %c0_i32_0 = arith.constant 0 : i32
    %c0_i32_1 = arith.constant 0 : i32
    return %c0_i32, %c0_i32_0 : i32, i32
  }
  func.func @transform_7(%arg0: i32) -> (i32, i32) {
    %c0_i32 = arith.constant 0 : i32
    %c0_i32_0 = arith.constant 0 : i32
    %c0_i32_1 = arith.constant 0 : i32
    return %c0_i32, %c0_i32_0 : i32, i32
  }
  func.func @transform_8(%arg0: i32) -> (i32, i32) {
    %c0_i32 = arith.constant 0 : i32
    %c0_i32_0 = arith.constant 0 : i32
    %c0_i32_1 = arith.constant 0 : i32
    return %c0_i32, %c0_i32_0 : i32, i32
  }
  func.func @transform_9(%arg0: i32) -> (i32, i32) {
    %c0_i32 = arith.constant 0 : i32
    %c0_i32_0 = arith.constant 0 : i32
    return %arg0, %c0_i32 : i32, i32
  }
}

</mosaic_0001>

<llo_original>
// kernel: tpu_custom_call.1
$region0: #{tpu_custom_call.1}
  #allocation0 [shape = 'u32[]', space=smem, size = 0x4, offset = 0x4, fixed_abs, tag = 'smem constant byte address 0x4 - core index']
  #allocation1 [shape = 'u32[72,128]{1,0:T(1,128)}', space=vmem, size = 0x9000, scoped, tag = 'internal scratch']
  #allocation2 [shape = 'bf16[8,128]{1,0:T(8,128)(2,1)}', space=vmem, size = 0x800, scoped, tag = 'scratch operand']
  %s0 = inlined_call_operand.vmem [shape: f32[8,100], index: 0, kind: input, shape index: {}]
  %s1 = inlined_call_operand.vmem [shape: bf16[128,128], index: 1, kind: input, shape index: {}]
  %s2 = inlined_call_operand.vmem [shape: f32[1,128], index: 2, kind: input, shape index: {}]
  %s3 = inlined_call_operand.vmem [shape: bf16[128,256], index: 3, kind: input, shape index: {}]
  %s4 = inlined_call_operand.vmem [shape: f32[1,256], index: 4, kind: input, shape index: {}]
  %s5 = inlined_call_operand.vmem [shape: bf16[256,512], index: 5, kind: input, shape index: {}]
  %s6 = inlined_call_operand.vmem [shape: f32[1,512], index: 6, kind: input, shape index: {}]
  %s7 = inlined_call_operand.vmem [shape: bf16[512,784], index: 7, kind: input, shape index: {}]
  %s8 = inlined_call_operand.vmem [shape: f32[1,784], index: 8, kind: input, shape index: {}]
  %s9 = inlined_call_operand.hbm [shape: bf16[8,784], index: 9, kind: output, shape index: {}]
  %s10 = sld [smem:[#allocation0]]
  $region46: #{tpu_custom_call.1} parent=0
    _
  %s12 = ssub.s32 1, %s10
  %s13 = scalar_select 0, %s12, %s10
  $region1: #{tpu_custom_call.1} parent=0
    #allocation3 [shape = 'u8[14336]{0}', space=vmem, size = 0x3800, scoped, tag = 'output window, operand 0, single buffered']
    #allocation4 [shape = 's32[1]{0}', space=sflag, size = 0x4, scoped, tag = 'scoped memory for tpu_custom_call.1']
    %14 = vsyncpa [#allocation4], 0
    // Predicated region
    $region2: #{tpu_custom_call.1} parent=1 // pred_check
      _
    $region3: #{tpu_custom_call.1} parent=1 // pred_check_branch
      %16 = sbr.rel (0) target = $region5
    $region4: #{tpu_custom_call.1} parent=1 // pred_region
      _
    $region5: #{tpu_custom_call.1} parent=1 // pred_fallthru
      _
    // Predicated region
    $region6: #{tpu_custom_call.1} parent=1 // pred_check
      _
    $region7: #{tpu_custom_call.1} parent=1 // pred_check_branch
      %18 = sbr.rel (0) target = $region9
    $region8: #{tpu_custom_call.1} parent=1 // pred_region
      _
    $region9: #{tpu_custom_call.1} parent=1 // pred_fallthru
      _
    // Predicated region
    $region10: #{tpu_custom_call.1} parent=1 // pred_check
      _
    $region11: #{tpu_custom_call.1} parent=1 // pred_check_branch
      %20 = sbr.rel (0) target = $region13
    $region12: #{tpu_custom_call.1} parent=1 // pred_region
      _
    $region13: #{tpu_custom_call.1} parent=1 // pred_fallthru
      _
    // Predicated region
    $region14: #{tpu_custom_call.1} parent=1 // pred_check
      _
    $region15: #{tpu_custom_call.1} parent=1 // pred_check_branch
      %22 = sbr.rel (0) target = $region17
    $region16: #{tpu_custom_call.1} parent=1 // pred_region
      _
    $region17: #{tpu_custom_call.1} parent=1 // pred_fallthru
      _
    // Predicated region
    $region18: #{tpu_custom_call.1} parent=1 // pred_check
      _
    $region19: #{tpu_custom_call.1} parent=1 // pred_check_branch
      %24 = sbr.rel (0) target = $region21
    $region20: #{tpu_custom_call.1} parent=1 // pred_region
      _
    $region21: #{tpu_custom_call.1} parent=1 // pred_fallthru
      _
    // Predicated region
    $region22: #{tpu_custom_call.1} parent=1 // pred_check
      _
    $region23: #{tpu_custom_call.1} parent=1 // pred_check_branch
      %26 = sbr.rel (0) target = $region25
    $region24: #{tpu_custom_call.1} parent=1 // pred_region
      _
    $region25: #{tpu_custom_call.1} parent=1 // pred_fallthru
      _
    // Predicated region
    $region26: #{tpu_custom_call.1} parent=1 // pred_check
      _
    $region27: #{tpu_custom_call.1} parent=1 // pred_check_branch
      %28 = sbr.rel (0) target = $region29
    $region28: #{tpu_custom_call.1} parent=1 // pred_region
      _
    $region29: #{tpu_custom_call.1} parent=1 // pred_fallthru
      _
    // Predicated region
    $region30: #{tpu_custom_call.1} parent=1 // pred_check
      _
    $region31: #{tpu_custom_call.1} parent=1 // pred_check_branch
      %30 = sbr.rel (0) target = $region33
    $region32: #{tpu_custom_call.1} parent=1 // pred_region
      _
    $region33: #{tpu_custom_call.1} parent=1 // pred_fallthru
      _
    // Predicated region
    $region34: #{tpu_custom_call.1} parent=1 // pred_check
      _
    $region35: #{tpu_custom_call.1} parent=1 // pred_check_branch
      %32 = sbr.rel (0) target = $region37
    $region36: #{tpu_custom_call.1} parent=1 // pred_region
      _
    $region37: #{tpu_custom_call.1} parent=1 // pred_fallthru
      _
    %34 = vst [vmem:[#allocation2] sm:$0xf] 0
    %v35 = vld [vmem:[%s0] sm:$0xff]
    %v36 = vpack.c.bf16 %v35, %v35
    %vm37 = vcmask 814080
    %38 = vst.msk [vmem:[#allocation2] sm:$0xf] %vm37, %v36
    %v39 = vld [vmem:[#allocation2] sm:$0xf]
    %v40 = vld [vmem:[%s1] sm:$0xf]
    %v41 = vld [vmem:[%s1 + $0x4] sm:$0xf]
    %v42 = vld [vmem:[%s1 + $0x8] sm:$0xf]
    %v43 = vld [vmem:[%s1 + $0xc] sm:$0xf]
    %v44 = vld [vmem:[%s1 + $0x10] sm:$0xf]
    %v45 = vld [vmem:[%s1 + $0x14] sm:$0xf]
    %v46 = vld [vmem:[%s1 + $0x18] sm:$0xf]
    %v47 = vld [vmem:[%s1 + $0x1c] sm:$0xf]
    %v48 = vld [vmem:[%s1 + $0x20] sm:$0xf]
    %v49 = vld [vmem:[%s1 + $0x24] sm:$0xf]
    %v50 = vld [vmem:[%s1 + $0x28] sm:$0xf]
    %v51 = vld [vmem:[%s1 + $0x2c] sm:$0xf]
    %v52 = vld [vmem:[%s1 + $0x30] sm:$0xf]
    %v53 = vld [vmem:[%s1 + $0x34] sm:$0xf]
    %v54 = vld [vmem:[%s1 + $0x38] sm:$0xf]
    %v55 = vld [vmem:[%s1 + $0x3c] sm:$0xf]
    %v56 = vld [vmem:[%s2] sm:$0x1]
    %v58 = vperm.slane %v56, 0
    %v76 = vunpack.c.l.b16 %v40
    %v77 = vunpack.c.l.b16 %v41
    %v78 = vunpack.c.l.b16 %v42
    %v79 = vunpack.c.l.b16 %v43
    %v80 = vunpack.c.l.b16 %v44
    %v81 = vunpack.c.l.b16 %v45
    %v82 = vunpack.c.l.b16 %v46
    %v83 = vunpack.c.l.b16 %v47
    %v84 = vunpack.c.l.b16 %v48
    %v85 = vunpack.c.l.b16 %v49
    %v86 = vunpack.c.l.b16 %v50
    %v87 = vunpack.c.l.b16 %v51
    %v88 = vunpack.c.l.b16 %v52
    %v89 = vunpack.c.l.b16 %v53
    %v90 = vunpack.c.l.b16 %v54
    %v91 = vunpack.c.l.b16 %v55
    %v92 = vpack.c.b16 %v77, %v76
    %v93 = vpack.c.b16 %v79, %v78
    %v94 = vpack.c.b16 %v81, %v80
    %v95 = vpack.c.b16 %v83, %v82
    %v96 = vpack.c.b16 %v85, %v84
    %v97 = vpack.c.b16 %v87, %v86
    %v98 = vpack.c.b16 %v89, %v88
    %v99 = vpack.c.b16 %v91, %v90
    %108 = vmatpush.bf16.msra.mxu0 %v99
    %109 = vmatpush.bf16.msra.mxu0 %v98
    %110 = vmatpush.bf16.msra.mxu0 %v97
    %111 = vmatpush.bf16.msra.mxu0 %v96
    %112 = vmatpush.bf16.msra.mxu0 %v95
    %113 = vmatpush.bf16.msra.mxu0 %v94
    %114 = vmatpush.bf16.msra.mxu0 %v93
    %115 = vmatpush.bf16.msra.mxu0 %v92
    %116 = vmatmul.bf16.gmra.mxu0 %v39
    %v117 = vpop.f32.mrf.mxu0
    %v118 = vadd.f32 %v58, %v117
    %v119 = vpop.f32.mrf.mxu0
    %120 = vdwg.mxu0
    %v121 = vmax.f32 %v118, 0.0
    %v122 = vpack.c.bf16 %v121, %v121
    %v123 = vld [vmem:[%s3] sm:$0xff]
    %v124 = vld [vmem:[%s3 + $0x8] sm:$0xff]
    %v125 = vld [vmem:[%s3 + $0x10] sm:$0xff]
    %v126 = vld [vmem:[%s3 + $0x18] sm:$0xff]
    %v127 = vld [vmem:[%s3 + $0x20] sm:$0xff]
    %v128 = vld [vmem:[%s3 + $0x28] sm:$0xff]
    %v129 = vld [vmem:[%s3 + $0x30] sm:$0xff]
    %v130 = vld [vmem:[%s3 + $0x38] sm:$0xff]
    %v131 = vld [vmem:[%s3 + $0x40] sm:$0xff]
    %v132 = vld [vmem:[%s3 + $0x48] sm:$0xff]
    %v133 = vld [vmem:[%s3 + $0x50] sm:$0xff]
    %v134 = vld [vmem:[%s3 + $0x58] sm:$0xff]
    %v135 = vld [vmem:[%s3 + $0x60] sm:$0xff]
    %v136 = vld [vmem:[%s3 + $0x68] sm:$0xff]
    %v137 = vld [vmem:[%s3 + $0x70] sm:$0xff]
    %v138 = vld [vmem:[%s3 + $0x78] sm:$0xff]
    %v139 = vld [vmem:[%s4] sm:$0x3]
    %v141 = vperm.slane %v139, 0
    %v142 = vperm.slane %v139, 1
    %v161 = vunpack.c.l.b16 %v123
    %v162 = vunpack.c.h.b16 %v123
    %v163 = vunpack.c.l.b16 %v124
    %v164 = vunpack.c.h.b16 %v124
    %v165 = vunpack.c.l.b16 %v125
    %v166 = vunpack.c.h.b16 %v125
    %v167 = vunpack.c.l.b16 %v126
    %v168 = vunpack.c.h.b16 %v126
    %v169 = vunpack.c.l.b16 %v127
    %v170 = vunpack.c.h.b16 %v127
    %v171 = vunpack.c.l.b16 %v128
    %v172 = vunpack.c.h.b16 %v128
    %v173 = vunpack.c.l.b16 %v129
    %v174 = vunpack.c.h.b16 %v129
    %v175 = vunpack.c.l.b16 %v130
    %v176 = vunpack.c.h.b16 %v130
    %v177 = vunpack.c.l.b16 %v131
    %v178 = vunpack.c.h.b16 %v131
    %v179 = vunpack.c.l.b16 %v132
    %v180 = vunpack.c.h.b16 %v132
    %v181 = vunpack.c.l.b16 %v133
    %v182 = vunpack.c.h.b16 %v133
    %v183 = vunpack.c.l.b16 %v134
    %v184 = vunpack.c.h.b16 %v134
    %v185 = vunpack.c.l.b16 %v135
    %v186 = vunpack.c.h.b16 %v135
    %v187 = vunpack.c.l.b16 %v136
    %v188 = vunpack.c.h.b16 %v136
    %v189 = vunpack.c.l.b16 %v137
    %v190 = vunpack.c.h.b16 %v137
    %v191 = vunpack.c.l.b16 %v138
    %v192 = vunpack.c.h.b16 %v138
    %v193 = vpack.c.b16 %v163, %v161
    %v194 = vpack.c.b16 %v164, %v162
    %v195 = vpack.c.b16 %v167, %v165
    %v196 = vpack.c.b16 %v168, %v166
    %v197 = vpack.c.b16 %v171, %v169
    %v198 = vpack.c.b16 %v172, %v170
    %v199 = vpack.c.b16 %v175, %v173
    %v200 = vpack.c.b16 %v176, %v174
    %v201 = vpack.c.b16 %v179, %v177
    %v202 = vpack.c.b16 %v180, %v178
    %v203 = vpack.c.b16 %v183, %v181
    %v204 = vpack.c.b16 %v184, %v182
    %v205 = vpack.c.b16 %v187, %v185
    %v206 = vpack.c.b16 %v188, %v186
    %v207 = vpack.c.b16 %v191, %v189
    %v208 = vpack.c.b16 %v192, %v190
    %225 = vmatpush.bf16.msra.mxu0 %v207
    %226 = vmatpush.bf16.msra.mxu0 %v205
    %227 = vmatpush.bf16.msra.mxu0 %v203
    %228 = vmatpush.bf16.msra.mxu0 %v201
    %229 = vmatpush.bf16.msra.mxu0 %v199
    %230 = vmatpush.bf16.msra.mxu0 %v197
    %231 = vmatpush.bf16.msra.mxu0 %v195
    %232 = vmatpush.bf16.msra.mxu0 %v193
    %233 = vmatmul.bf16.gmra.mxu0 %v122
    %v234 = vpop.f32.mrf.mxu0
    %v235 = vadd.f32 %v141, %v234
    %v236 = vpop.f32.mrf.mxu0
    %237 = vdwg.mxu0
    %238 = vmatpush.bf16.msra.mxu0 %v208
    %239 = vmatpush.bf16.msra.mxu0 %v206
    %240 = vmatpush.bf16.msra.mxu0 %v204
    %241 = vmatpush.bf16.msra.mxu0 %v202
    %242 = vmatpush.bf16.msra.mxu0 %v200
    %243 = vmatpush.bf16.msra.mxu0 %v198
    %244 = vmatpush.bf16.msra.mxu0 %v196
    %245 = vmatpush.bf16.msra.mxu0 %v194
    %246 = vmatmul.bf16.gmra.mxu0 %v122
    %v247 = vpop.f32.mrf.mxu0
    %v248 = vadd.f32 %v142, %v247
    %v249 = vpop.f32.mrf.mxu0
    %250 = vdwg.mxu0
    %v251 = vmax.f32 %v235, 0.0
    %v252 = vmax.f32 %v248, 0.0
    %v253 = vpack.c.bf16 %v251, %v251
    %v254 = vpack.c.bf16 %v252, %v252
    %v255 = vld [vmem:[%s5] sm:$0xff]
    %v256 = vld [vmem:[%s5 + $0x8] sm:$0xff]
    %v257 = vld [vmem:[%s5 + $0x10] sm:$0xff]
    %v258 = vld [vmem:[%s5 + $0x18] sm:$0xff]
    %v259 = vld [vmem:[%s5 + $0x20] sm:$0xff]
    %v260 = vld [vmem:[%s5 + $0x28] sm:$0xff]
    %v261 = vld [vmem:[%s5 + $0x30] sm:$0xff]
    %v262 = vld [vmem:[%s5 + $0x38] sm:$0xff]
    %v263 = vld [vmem:[%s5 + $0x40] sm:$0xff]
    %v264 = vld [vmem:[%s5 + $0x48] sm:$0xff]
    %v265 = vld [vmem:[%s5 + $0x50] sm:$0xff]
    %v266 = vld [vmem:[%s5 + $0x58] sm:$0xff]
    %v267 = vld [vmem:[%s5 + $0x60] sm:$0xff]
    %v268 = vld [vmem:[%s5 + $0x68] sm:$0xff]
    %v269 = vld [vmem:[%s5 + $0x70] sm:$0xff]
    %v270 = vld [vmem:[%s5 + $0x78] sm:$0xff]
    %v271 = vld [vmem:[%s5 + $0x80] sm:$0xff]
    %v272 = vld [vmem:[%s5 + $0x88] sm:$0xff]
    %v273 = vld [vmem:[%s5 + $0x90] sm:$0xff]
    %v274 = vld [vmem:[%s5 + $0x98] sm:$0xff]
    %v275 = vld [vmem:[%s5 + $0xa0] sm:$0xff]
    %v276 = vld [vmem:[%s5 + $0xa8] sm:$0xff]
    %v277 = vld [vmem:[%s5 + $0xb0] sm:$0xff]
    %v278 = vld [vmem:[%s5 + $0xb8] sm:$0xff]
    %v279 = vld [vmem:[%s5 + $0xc0] sm:$0xff]
    %v280 = vld [vmem:[%s5 + $0xc8] sm:$0xff]
    %v281 = vld [vmem:[%s5 + $0xd0] sm:$0xff]
    %v282 = vld [vmem:[%s5 + $0xd8] sm:$0xff]
    %v283 = vld [vmem:[%s5 + $0xe0] sm:$0xff]
    %v284 = vld [vmem:[%s5 + $0xe8] sm:$0xff]
    %v285 = vld [vmem:[%s5 + $0xf0] sm:$0xff]
    %v286 = vld [vmem:[%s5 + $0xf8] sm:$0xff]
    %v287 = vld [vmem:[%s5 + $0x100] sm:$0xff]
    %v288 = vld [vmem:[%s5 + $0x108] sm:$0xff]
    %v289 = vld [vmem:[%s5 + $0x110] sm:$0xff]
    %v290 = vld [vmem:[%s5 + $0x118] sm:$0xff]
    %v291 = vld [vmem:[%s5 + $0x120] sm:$0xff]
    %v292 = vld [vmem:[%s5 + $0x128] sm:$0xff]
    %v293 = vld [vmem:[%s5 + $0x130] sm:$0xff]
    %v294 = vld [vmem:[%s5 + $0x138] sm:$0xff]
    %v295 = vld [vmem:[%s5 + $0x140] sm:$0xff]
    %v296 = vld [vmem:[%s5 + $0x148] sm:$0xff]
    %v297 = vld [vmem:[%s5 + $0x150] sm:$0xff]
    %v298 = vld [vmem:[%s5 + $0x158] sm:$0xff]
    %v299 = vld [vmem:[%s5 + $0x160] sm:$0xff]
    %v300 = vld [vmem:[%s5 + $0x168] sm:$0xff]
    %v301 = vld [vmem:[%s5 + $0x170] sm:$0xff]
    %v302 = vld [vmem:[%s5 + $0x178] sm:$0xff]
    %v303 = vld [vmem:[%s5 + $0x180] sm:$0xff]
    %v304 = vld [vmem:[%s5 + $0x188] sm:$0xff]
    %v305 = vld [vmem:[%s5 + $0x190] sm:$0xff]
    %v306 = vld [vmem:[%s5 + $0x198] sm:$0xff]
    %v307 = vld [vmem:[%s5 + $0x1a0] sm:$0xff]
    %v308 = vld [vmem:[%s5 + $0x1a8] sm:$0xff]
    %v309 = vld [vmem:[%s5 + $0x1b0] sm:$0xff]
    %v310 = vld [vmem:[%s5 + $0x1b8] sm:$0xff]
    %v311 = vld [vmem:[%s5 + $0x1c0] sm:$0xff]
    %v312 = vld [vmem:[%s5 + $0x1c8] sm:$0xff]
    %v313 = vld [vmem:[%s5 + $0x1d0] sm:$0xff]
    %v314 = vld [vmem:[%s5 + $0x1d8] sm:$0xff]
    %v315 = vld [vmem:[%s5 + $0x1e0] sm:$0xff]
    %v316 = vld [vmem:[%s5 + $0x1e8] sm:$0xff]
    %v317 = vld [vmem:[%s5 + $0x1f0] sm:$0xff]
    %v318 = vld [vmem:[%s5 + $0x1f8] sm:$0xff]
    %v319 = vld [vmem:[%s6] sm:$0xf]
    %v321 = vperm.slane %v319, 0
    %v322 = vperm.slane %v319, 1
    %v323 = vperm.slane %v319, 2
    %v324 = vperm.slane %v319, 3
    %v393 = vunpack.c.l.b16 %v255
    %v394 = vunpack.c.h.b16 %v255
    %v395 = vunpack.c.l.b16 %v256
    %v396 = vunpack.c.h.b16 %v256
    %v397 = vunpack.c.l.b16 %v257
    %v398 = vunpack.c.h.b16 %v257
    %v399 = vunpack.c.l.b16 %v258
    %v400 = vunpack.c.h.b16 %v258
    %v401 = vunpack.c.l.b16 %v259
    %v402 = vunpack.c.h.b16 %v259
    %v403 = vunpack.c.l.b16 %v260
    %v404 = vunpack.c.h.b16 %v260
    %v405 = vunpack.c.l.b16 %v261
    %v406 = vunpack.c.h.b16 %v261
    %v407 = vunpack.c.l.b16 %v262
    %v408 = vunpack.c.h.b16 %v262
    %v409 = vunpack.c.l.b16 %v263
    %v410 = vunpack.c.h.b16 %v263
    %v411 = vunpack.c.l.b16 %v264
    %v412 = vunpack.c.h.b16 %v264
    %v413 = vunpack.c.l.b16 %v265
    %v414 = vunpack.c.h.b16 %v265
    %v415 = vunpack.c.l.b16 %v266
    %v416 = vunpack.c.h.b16 %v266
    %v417 = vunpack.c.l.b16 %v267
    %v418 = vunpack.c.h.b16 %v267
    %v419 = vunpack.c.l.b16 %v268
    %v420 = vunpack.c.h.b16 %v268
    %v421 = vunpack.c.l.b16 %v269
    %v422 = vunpack.c.h.b16 %v269
    %v423 = vunpack.c.l.b16 %v270
    %v424 = vunpack.c.h.b16 %v270
    %v425 = vunpack.c.l.b16 %v271
    %v426 = vunpack.c.h.b16 %v271
    %v427 = vunpack.c.l.b16 %v272
    %v428 = vunpack.c.h.b16 %v272
    %v429 = vunpack.c.l.b16 %v273
    %v430 = vunpack.c.h.b16 %v273
    %v431 = vunpack.c.l.b16 %v274
    %v432 = vunpack.c.h.b16 %v274
    %v433 = vunpack.c.l.b16 %v275
    %v434 = vunpack.c.h.b16 %v275
    %v435 = vunpack.c.l.b16 %v276
    %v436 = vunpack.c.h.b16 %v276
    %v437 = vunpack.c.l.b16 %v277
    %v438 = vunpack.c.h.b16 %v277
    %v439 = vunpack.c.l.b16 %v278
    %v440 = vunpack.c.h.b16 %v278
    %v441 = vunpack.c.l.b16 %v279
    %v442 = vunpack.c.h.b16 %v279
    %v443 = vunpack.c.l.b16 %v280
    %v444 = vunpack.c.h.b16 %v280
    %v445 = vunpack.c.l.b16 %v281
    %v446 = vunpack.c.h.b16 %v281
    %v447 = vunpack.c.l.b16 %v282
    %v448 = vunpack.c.h.b16 %v282
    %v449 = vunpack.c.l.b16 %v283
    %v450 = vunpack.c.h.b16 %v283
    %v451 = vunpack.c.l.b16 %v284
    %v452 = vunpack.c.h.b16 %v284
    %v453 = vunpack.c.l.b16 %v285
    %v454 = vunpack.c.h.b16 %v285
    %v455 = vunpack.c.l.b16 %v286
    %v456 = vunpack.c.h.b16 %v286
    %v457 = vunpack.c.l.b16 %v287
    %v458 = vunpack.c.h.b16 %v287
    %v459 = vunpack.c.l.b16 %v288
    %v460 = vunpack.c.h.b16 %v288
    %v461 = vunpack.c.l.b16 %v289
    %v462 = vunpack.c.h.b16 %v289
    %v463 = vunpack.c.l.b16 %v290
    %v464 = vunpack.c.h.b16 %v290
    %v465 = vunpack.c.l.b16 %v291
    %v466 = vunpack.c.h.b16 %v291
    %v467 = vunpack.c.l.b16 %v292
    %v468 = vunpack.c.h.b16 %v292
    %v469 = vunpack.c.l.b16 %v293
    %v470 = vunpack.c.h.b16 %v293
    %v471 = vunpack.c.l.b16 %v294
    %v472 = vunpack.c.h.b16 %v294
    %v473 = vunpack.c.l.b16 %v295
    %v474 = vunpack.c.h.b16 %v295
    %v475 = vunpack.c.l.b16 %v296
    %v476 = vunpack.c.h.b16 %v296
    %v477 = vunpack.c.l.b16 %v297
    %v478 = vunpack.c.h.b16 %v297
    %v479 = vunpack.c.l.b16 %v298
    %v480 = vunpack.c.h.b16 %v298
    %v481 = vunpack.c.l.b16 %v299
    %v482 = vunpack.c.h.b16 %v299
    %v483 = vunpack.c.l.b16 %v300
    %v484 = vunpack.c.h.b16 %v300
    %v485 = vunpack.c.l.b16 %v301
    %v486 = vunpack.c.h.b16 %v301
    %v487 = vunpack.c.l.b16 %v302
    %v488 = vunpack.c.h.b16 %v302
    %v489 = vunpack.c.l.b16 %v303
    %v490 = vunpack.c.h.b16 %v303
    %v491 = vunpack.c.l.b16 %v304
    %v492 = vunpack.c.h.b16 %v304
    %v493 = vunpack.c.l.b16 %v305
    %v494 = vunpack.c.h.b16 %v305
    %v495 = vunpack.c.l.b16 %v306
    %v496 = vunpack.c.h.b16 %v306
    %v497 = vunpack.c.l.b16 %v307
    %v498 = vunpack.c.h.b16 %v307
    %v499 = vunpack.c.l.b16 %v308
    %v500 = vunpack.c.h.b16 %v308
    %v501 = vunpack.c.l.b16 %v309
    %v502 = vunpack.c.h.b16 %v309
    %v503 = vunpack.c.l.b16 %v310
    %v504 = vunpack.c.h.b16 %v310
    %v505 = vunpack.c.l.b16 %v311
    %v506 = vunpack.c.h.b16 %v311
    %v507 = vunpack.c.l.b16 %v312
    %v508 = vunpack.c.h.b16 %v312
    %v509 = vunpack.c.l.b16 %v313
    %v510 = vunpack.c.h.b16 %v313
    %v511 = vunpack.c.l.b16 %v314
    %v512 = vunpack.c.h.b16 %v314
    %v513 = vunpack.c.l.b16 %v315
    %v514 = vunpack.c.h.b16 %v315
    %v515 = vunpack.c.l.b16 %v316
    %v516 = vunpack.c.h.b16 %v316
    %v517 = vunpack.c.l.b16 %v317
    %v518 = vunpack.c.h.b16 %v317
    %v519 = vunpack.c.l.b16 %v318
    %v520 = vunpack.c.h.b16 %v318
    %v521 = vpack.c.b16 %v397, %v393
    %v522 = vpack.c.b16 %v398, %v394
    %v523 = vpack.c.b16 %v399, %v395
    %v524 = vpack.c.b16 %v400, %v396
    %v525 = vpack.c.b16 %v405, %v401
    %v526 = vpack.c.b16 %v406, %v402
    %v527 = vpack.c.b16 %v407, %v403
    %v528 = vpack.c.b16 %v408, %v404
    %v529 = vpack.c.b16 %v413, %v409
    %v530 = vpack.c.b16 %v414, %v410
    %v531 = vpack.c.b16 %v415, %v411
    %v532 = vpack.c.b16 %v416, %v412
    %v533 = vpack.c.b16 %v421, %v417
    %v534 = vpack.c.b16 %v422, %v418
    %v535 = vpack.c.b16 %v423, %v419
    %v536 = vpack.c.b16 %v424, %v420
    %v537 = vpack.c.b16 %v429, %v425
    %v538 = vpack.c.b16 %v430, %v426
    %v539 = vpack.c.b16 %v431, %v427
    %v540 = vpack.c.b16 %v432, %v428
    %v541 = vpack.c.b16 %v437, %v433
    %v542 = vpack.c.b16 %v438, %v434
    %v543 = vpack.c.b16 %v439, %v435
    %v544 = vpack.c.b16 %v440, %v436
    %v545 = vpack.c.b16 %v445, %v441
    %v546 = vpack.c.b16 %v446, %v442
    %v547 = vpack.c.b16 %v447, %v443
    %v548 = vpack.c.b16 %v448, %v444
    %v549 = vpack.c.b16 %v453, %v449
    %v550 = vpack.c.b16 %v454, %v450
    %v551 = vpack.c.b16 %v455, %v451
    %v552 = vpack.c.b16 %v456, %v452
    %v553 = vpack.c.b16 %v461, %v457
    %v554 = vpack.c.b16 %v462, %v458
    %v555 = vpack.c.b16 %v463, %v459
    %v556 = vpack.c.b16 %v464, %v460
    %v557 = vpack.c.b16 %v469, %v465
    %v558 = vpack.c.b16 %v470, %v466
    %v559 = vpack.c.b16 %v471, %v467
    %v560 = vpack.c.b16 %v472, %v468
    %v561 = vpack.c.b16 %v477, %v473
    %v562 = vpack.c.b16 %v478, %v474
    %v563 = vpack.c.b16 %v479, %v475
    %v564 = vpack.c.b16 %v480, %v476
    %v565 = vpack.c.b16 %v485, %v481
    %v566 = vpack.c.b16 %v486, %v482
    %v567 = vpack.c.b16 %v487, %v483
    %v568 = vpack.c.b16 %v488, %v484
    %v569 = vpack.c.b16 %v493, %v489
    %v570 = vpack.c.b16 %v494, %v490
    %v571 = vpack.c.b16 %v495, %v491
    %v572 = vpack.c.b16 %v496, %v492
    %v573 = vpack.c.b16 %v501, %v497
    %v574 = vpack.c.b16 %v502, %v498
    %v575 = vpack.c.b16 %v503, %v499
    %v576 = vpack.c.b16 %v504, %v500
    %v577 = vpack.c.b16 %v509, %v505
    %v578 = vpack.c.b16 %v510, %v506
    %v579 = vpack.c.b16 %v511, %v507
    %v580 = vpack.c.b16 %v512, %v508
    %v581 = vpack.c.b16 %v517, %v513
    %v582 = vpack.c.b16 %v518, %v514
    %v583 = vpack.c.b16 %v519, %v515
    %v584 = vpack.c.b16 %v520, %v516
    %649 = vmatpush.bf16.msra.mxu0 %v549
    %650 = vmatpush.bf16.msra.mxu0 %v545
    %651 = vmatpush.bf16.msra.mxu0 %v541
    %652 = vmatpush.bf16.msra.mxu0 %v537
    %653 = vmatpush.bf16.msra.mxu0 %v533
    %654 = vmatpush.bf16.msra.mxu0 %v529
    %655 = vmatpush.bf16.msra.mxu0 %v525
    %656 = vmatpush.bf16.msra.mxu0 %v521
    %657 = vmatmul.bf16.gmra.mxu0 %v253
    %v658 = vpop.f32.mrf.mxu0
    %v659 = vadd.f32 %v321, %v658
    %v660 = vpop.f32.mrf.mxu0
    %661 = vdwg.mxu0
    %662 = vmatpush.bf16.msra.mxu0 %v581
    %663 = vmatpush.bf16.msra.mxu0 %v577
    %664 = vmatpush.bf16.msra.mxu0 %v573
    %665 = vmatpush.bf16.msra.mxu0 %v569
    %666 = vmatpush.bf16.msra.mxu0 %v565
    %667 = vmatpush.bf16.msra.mxu0 %v561
    %668 = vmatpush.bf16.msra.mxu0 %v557
    %669 = vmatpush.bf16.msra.mxu0 %v553
    %670 = vmatmul.bf16.gmra.mxu0 %v254
    %v671 = vpop.f32.mrf.mxu0
    %v672 = vadd.f32 %v659, %v671
    %v673 = vpop.f32.mrf.mxu0
    %674 = vdwg.mxu0
    %675 = vmatpush.bf16.msra.mxu0 %v550
    %676 = vmatpush.bf16.msra.mxu0 %v546
    %677 = vmatpush.bf16.msra.mxu0 %v542
    %678 = vmatpush.bf16.msra.mxu0 %v538
    %679 = vmatpush.bf16.msra.mxu0 %v534
    %680 = vmatpush.bf16.msra.mxu0 %v530
    %681 = vmatpush.bf16.msra.mxu0 %v526
    %682 = vmatpush.bf16.msra.mxu0 %v522
    %683 = vmatmul.bf16.gmra.mxu0 %v253
    %v684 = vpop.f32.mrf.mxu0
    %v685 = vadd.f32 %v322, %v684
    %v686 = vpop.f32.mrf.mxu0
    %687 = vdwg.mxu0
    %688 = vmatpush.bf16.msra.mxu0 %v582
    %689 = vmatpush.bf16.msra.mxu0 %v578
    %690 = vmatpush.bf16.msra.mxu0 %v574
    %691 = vmatpush.bf16.msra.mxu0 %v570
    %692 = vmatpush.bf16.msra.mxu0 %v566
    %693 = vmatpush.bf16.msra.mxu0 %v562
    %694 = vmatpush.bf16.msra.mxu0 %v558
    %695 = vmatpush.bf16.msra.mxu0 %v554
    %696 = vmatmul.bf16.gmra.mxu0 %v254
    %v697 = vpop.f32.mrf.mxu0
    %v698 = vadd.f32 %v685, %v697
    %v699 = vpop.f32.mrf.mxu0
    %700 = vdwg.mxu0
    %701 = vmatpush.bf16.msra.mxu0 %v551
    %702 = vmatpush.bf16.msra.mxu0 %v547
    %703 = vmatpush.bf16.msra.mxu0 %v543
    %704 = vmatpush.bf16.msra.mxu0 %v539
    %705 = vmatpush.bf16.msra.mxu0 %v535
    %706 = vmatpush.bf16.msra.mxu0 %v531
    %707 = vmatpush.bf16.msra.mxu0 %v527
    %708 = vmatpush.bf16.msra.mxu0 %v523
    %709 = vmatmul.bf16.gmra.mxu0 %v253
    %v710 = vpop.f32.mrf.mxu0
    %v711 = vadd.f32 %v323, %v710
    %v712 = vpop.f32.mrf.mxu0
    %713 = vdwg.mxu0
    %714 = vmatpush.bf16.msra.mxu0 %v583
    %715 = vmatpush.bf16.msra.mxu0 %v579
    %716 = vmatpush.bf16.msra.mxu0 %v575
    %717 = vmatpush.bf16.msra.mxu0 %v571
    %718 = vmatpush.bf16.msra.mxu0 %v567
    %719 = vmatpush.bf16.msra.mxu0 %v563
    %720 = vmatpush.bf16.msra.mxu0 %v559
    %721 = vmatpush.bf16.msra.mxu0 %v555
    %722 = vmatmul.bf16.gmra.mxu0 %v254
    %v723 = vpop.f32.mrf.mxu0
    %v724 = vadd.f32 %v711, %v723
    %v725 = vpop.f32.mrf.mxu0
    %726 = vdwg.mxu0
    %727 = vmatpush.bf16.msra.mxu0 %v552
    %728 = vmatpush.bf16.msra.mxu0 %v548
    %729 = vmatpush.bf16.msra.mxu0 %v544
    %730 = vmatpush.bf16.msra.mxu0 %v540
    %731 = vmatpush.bf16.msra.mxu0 %v536
    %732 = vmatpush.bf16.msra.mxu0 %v532
    %733 = vmatpush.bf16.msra.mxu0 %v528
    %734 = vmatpush.bf16.msra.mxu0 %v524
    %735 = vmatmul.bf16.gmra.mxu0 %v253
    %v736 = vpop.f32.mrf.mxu0
    %v737 = vadd.f32 %v324, %v736
    %v738 = vpop.f32.mrf.mxu0
    %739 = vdwg.mxu0
    %740 = vmatpush.bf16.msra.mxu0 %v584
    %741 = vmatpush.bf16.msra.mxu0 %v580
    %742 = vmatpush.bf16.msra.mxu0 %v576
    %743 = vmatpush.bf16.msra.mxu0 %v572
    %744 = vmatpush.bf16.msra.mxu0 %v568
    %745 = vmatpush.bf16.msra.mxu0 %v564
    %746 = vmatpush.bf16.msra.mxu0 %v560
    %747 = vmatpush.bf16.msra.mxu0 %v556
    %748 = vmatmul.bf16.gmra.mxu0 %v254
    %v749 = vpop.f32.mrf.mxu0
    %v750 = vadd.f32 %v737, %v749
    %v751 = vpop.f32.mrf.mxu0
    %752 = vdwg.mxu0
    %v753 = vmax.f32 %v672, 0.0
    %v754 = vmax.f32 %v698, 0.0
    %v755 = vmax.f32 %v724, 0.0
    %v756 = vmax.f32 %v750, 0.0
    %v757 = vpack.c.bf16 %v753, %v753
    %v758 = vpack.c.bf16 %v754, %v754
    %v759 = vpack.c.bf16 %v755, %v755
    %v760 = vpack.c.bf16 %v756, %v756
    %v761 = vld [vmem:[%s7] sm:$0xff]
    %v762 = vld [vmem:[%s7 + $0x8] sm:$0xff]
    %v763 = vld [vmem:[%s7 + $0x10] sm:$0xff]
    %v764 = vld [vmem:[%s7 + $0x18] sm:$0xf]
    %v765 = vld [vmem:[%s7 + $0x1c] sm:$0xff]
    %v766 = vld [vmem:[%s7 + $0x24] sm:$0xff]
    %v767 = vld [vmem:[%s7 + $0x2c] sm:$0xff]
    %v768 = vld [vmem:[%s7 + $0x34] sm:$0xf]
    %v769 = vld [vmem:[%s7 + $0x38] sm:$0xff]
    %v770 = vld [vmem:[%s7 + $0x40] sm:$0xff]
    %v771 = vld [vmem:[%s7 + $0x48] sm:$0xff]
    %v772 = vld [vmem:[%s7 + $0x50] sm:$0xf]
    %v773 = vld [vmem:[%s7 + $0x54] sm:$0xff]
    %v774 = vld [vmem:[%s7 + $0x5c] sm:$0xff]
    %v775 = vld [vmem:[%s7 + $0x64] sm:$0xff]
    %v776 = vld [vmem:[%s7 + $0x6c] sm:$0xf]
    %v777 = vld [vmem:[%s7 + $0x70] sm:$0xff]
    %v778 = vld [vmem:[%s7 + $0x78] sm:$0xff]
    %v779 = vld [vmem:[%s7 + $0x80] sm:$0xff]
    %v780 = vld [vmem:[%s7 + $0x88] sm:$0xf]
    %v781 = vld [vmem:[%s7 + $0x8c] sm:$0xff]
    %v782 = vld [vmem:[%s7 + $0x94] sm:$0xff]
    %v783 = vld [vmem:[%s7 + $0x9c] sm:$0xff]
    %v784 = vld [vmem:[%s7 + $0xa4] sm:$0xf]
    %v785 = vld [vmem:[%s7 + $0xa8] sm:$0xff]
    %v786 = vld [vmem:[%s7 + $0xb0] sm:$0xff]
    %v787 = vld [vmem:[%s7 + $0xb8] sm:$0xff]
    %v788 = vld [vmem:[%s7 + $0xc0] sm:$0xf]
    %v789 = vld [vmem:[%s7 + $0xc4] sm:$0xff]
    %v790 = vld [vmem:[%s7 + $0xcc] sm:$0xff]
    %v791 = vld [vmem:[%s7 + $0xd4] sm:$0xff]
    %v792 = vld [vmem:[%s7 + $0xdc] sm:$0xf]
    %v793 = vld [vmem:[%s7 + $0xe0] sm:$0xff]
    %v794 = vld [vmem:[%s7 + $0xe8] sm:$0xff]
    %v795 = vld [vmem:[%s7 + $0xf0] sm:$0xff]
    %v796 = vld [vmem:[%s7 + $0xf8] sm:$0xf]
    %v797 = vld [vmem:[%s7 + $0xfc] sm:$0xff]
    %v798 = vld [vmem:[%s7 + $0x104] sm:$0xff]
    %v799 = vld [vmem:[%s7 + $0x10c] sm:$0xff]
    %v800 = vld [vmem:[%s7 + $0x114] sm:$0xf]
    %v801 = vld [vmem:[%s7 + $0x118] sm:$0xff]
    %v802 = vld [vmem:[%s7 + $0x120] sm:$0xff]
    %v803 = vld [vmem:[%s7 + $0x128] sm:$0xff]
    %v804 = vld [vmem:[%s7 + $0x130] sm:$0xf]
    %v805 = vld [vmem:[%s7 + $0x134] sm:$0xff]
    %v806 = vld [vmem:[%s7 + $0x13c] sm:$0xff]
    %v807 = vld [vmem:[%s7 + $0x144] sm:$0xff]
    %v808 = vld [vmem:[%s7 + $0x14c] sm:$0xf]
    %v809 = vld [vmem:[%s7 + $0x150] sm:$0xff]
    %v810 = vld [vmem:[%s7 + $0x158] sm:$0xff]
    %v811 = vld [vmem:[%s7 + $0x160] sm:$0xff]
    %v812 = vld [vmem:[%s7 + $0x168] sm:$0xf]
    %v813 = vld [vmem:[%s7 + $0x16c] sm:$0xff]
    %v814 = vld [vmem:[%s7 + $0x174] sm:$0xff]
    %v815 = vld [vmem:[%s7 + $0x17c] sm:$0xff]
    %v816 = vld [vmem:[%s7 + $0x184] sm:$0xf]
    %v817 = vld [vmem:[%s7 + $0x188] sm:$0xff]
    %v818 = vld [vmem:[%s7 + $0x190] sm:$0xff]
    %v819 = vld [vmem:[%s7 + $0x198] sm:$0xff]
    %v820 = vld [vmem:[%s7 + $0x1a0] sm:$0xf]
    %v821 = vld [vmem:[%s7 + $0x1a4] sm:$0xff]
    %v822 = vld [vmem:[%s7 + $0x1ac] sm:$0xff]
    %v823 = vld [vmem:[%s7 + $0x1b4] sm:$0xff]
    %v824 = vld [vmem:[%s7 + $0x1bc] sm:$0xf]
    %v825 = vld [vmem:[%s7 + $0x1c0] sm:$0xff]
    %v826 = vld [vmem:[%s7 + $0x1c8] sm:$0xff]
    %v827 = vld [vmem:[%s7 + $0x1d0] sm:$0xff]
    %v828 = vld [vmem:[%s7 + $0x1d8] sm:$0xf]
    %v829 = vld [vmem:[%s7 + $0x1dc] sm:$0xff]
    %v830 = vld [vmem:[%s7 + $0x1e4] sm:$0xff]
    %v831 = vld [vmem:[%s7 + $0x1ec] sm:$0xff]
    %v832 = vld [vmem:[%s7 + $0x1f4] sm:$0xf]
    %v833 = vld [vmem:[%s7 + $0x1f8] sm:$0xff]
    %v834 = vld [vmem:[%s7 + $0x200] sm:$0xff]
    %v835 = vld [vmem:[%s7 + $0x208] sm:$0xff]
    %v836 = vld [vmem:[%s7 + $0x210] sm:$0xf]
    %v837 = vld [vmem:[%s7 + $0x214] sm:$0xff]
    %v838 = vld [vmem:[%s7 + $0x21c] sm:$0xff]
    %v839 = vld [vmem:[%s7 + $0x224] sm:$0xff]
    %v840 = vld [vmem:[%s7 + $0x22c] sm:$0xf]
    %v841 = vld [vmem:[%s7 + $0x230] sm:$0xff]
    %v842 = vld [vmem:[%s7 + $0x238] sm:$0xff]
    %v843 = vld [vmem:[%s7 + $0x240] sm:$0xff]
    %v844 = vld [vmem:[%s7 + $0x248] sm:$0xf]
    %v845 = vld [vmem:[%s7 + $0x24c] sm:$0xff]
    %v846 = vld [vmem:[%s7 + $0x254] sm:$0xff]
    %v847 = vld [vmem:[%s7 + $0x25c] sm:$0xff]
    %v848 = vld [vmem:[%s7 + $0x264] sm:$0xf]
    %v849 = vld [vmem:[%s7 + $0x268] sm:$0xff]
    %v850 = vld [vmem:[%s7 + $0x270] sm:$0xff]
    %v851 = vld [vmem:[%s7 + $0x278] sm:$0xff]
    %v852 = vld [vmem:[%s7 + $0x280] sm:$0xf]
    %v853 = vld [vmem:[%s7 + $0x284] sm:$0xff]
    %v854 = vld [vmem:[%s7 + $0x28c] sm:$0xff]
    %v855 = vld [vmem:[%s7 + $0x294] sm:$0xff]
    %v856 = vld [vmem:[%s7 + $0x29c] sm:$0xf]
    %v857 = vld [vmem:[%s7 + $0x2a0] sm:$0xff]
    %v858 = vld [vmem:[%s7 + $0x2a8] sm:$0xff]
    %v859 = vld [vmem:[%s7 + $0x2b0] sm:$0xff]
    %v860 = vld [vmem:[%s7 + $0x2b8] sm:$0xf]
    %v861 = vld [vmem:[%s7 + $0x2bc] sm:$0xff]
    %v862 = vld [vmem:[%s7 + $0x2c4] sm:$0xff]
    %v863 = vld [vmem:[%s7 + $0x2cc] sm:$0xff]
    %v864 = vld [vmem:[%s7 + $0x2d4] sm:$0xf]
    %v865 = vld [vmem:[%s7 + $0x2d8] sm:$0xff]
    %v866 = vld [vmem:[%s7 + $0x2e0] sm:$0xff]
    %v867 = vld [vmem:[%s7 + $0x2e8] sm:$0xff]
    %v868 = vld [vmem:[%s7 + $0x2f0] sm:$0xf]
    %v869 = vld [vmem:[%s7 + $0x2f4] sm:$0xff]
    %v870 = vld [vmem:[%s7 + $0x2fc] sm:$0xff]
    %v871 = vld [vmem:[%s7 + $0x304] sm:$0xff]
    %v872 = vld [vmem:[%s7 + $0x30c] sm:$0xf]
    %v873 = vld [vmem:[%s7 + $0x310] sm:$0xff]
    %v874 = vld [vmem:[%s7 + $0x318] sm:$0xff]
    %v875 = vld [vmem:[%s7 + $0x320] sm:$0xff]
    %v876 = vld [vmem:[%s7 + $0x328] sm:$0xf]
    %v877 = vld [vmem:[%s7 + $0x32c] sm:$0xff]
    %v878 = vld [vmem:[%s7 + $0x334] sm:$0xff]
    %v879 = vld [vmem:[%s7 + $0x33c] sm:$0xff]
    %v880 = vld [vmem:[%s7 + $0x344] sm:$0xf]
    %v881 = vld [vmem:[%s7 + $0x348] sm:$0xff]
    %v882 = vld [vmem:[%s7 + $0x350] sm:$0xff]
    %v883 = vld [vmem:[%s7 + $0x358] sm:$0xff]
    %v884 = vld [vmem:[%s7 + $0x360] sm:$0xf]
    %v885 = vld [vmem:[%s7 + $0x364] sm:$0xff]
    %v886 = vld [vmem:[%s7 + $0x36c] sm:$0xff]
    %v887 = vld [vmem:[%s7 + $0x374] sm:$0xff]
    %v888 = vld [vmem:[%s7 + $0x37c] sm:$0xf]
    %v889 = vld [vmem:[%s7 + $0x380] sm:$0xff]
    %v890 = vld [vmem:[%s7 + $0x388] sm:$0xff]
    %v891 = vld [vmem:[%s7 + $0x390] sm:$0xff]
    %v892 = vld [vmem:[%s7 + $0x398] sm:$0xf]
    %v893 = vld [vmem:[%s7 + $0x39c] sm:$0xff]
    %v894 = vld [vmem:[%s7 + $0x3a4] sm:$0xff]
    %v895 = vld [vmem:[%s7 + $0x3ac] sm:$0xff]
    %v896 = vld [vmem:[%s7 + $0x3b4] sm:$0xf]
    %v897 = vld [vmem:[%s7 + $0x3b8] sm:$0xff]
    %v898 = vld [vmem:[%s7 + $0x3c0] sm:$0xff]
    %v899 = vld [vmem:[%s7 + $0x3c8] sm:$0xff]
    %v900 = vld [vmem:[%s7 + $0x3d0] sm:$0xf]
    %v901 = vld [vmem:[%s7 + $0x3d4] sm:$0xff]
    %v902 = vld [vmem:[%s7 + $0x3dc] sm:$0xff]
    %v903 = vld [vmem:[%s7 + $0x3e4] sm:$0xff]
    %v904 = vld [vmem:[%s7 + $0x3ec] sm:$0xf]
    %v905 = vld [vmem:[%s7 + $0x3f0] sm:$0xff]
    %v906 = vld [vmem:[%s7 + $0x3f8] sm:$0xff]
    %v907 = vld [vmem:[%s7 + $0x400] sm:$0xff]
    %v908 = vld [vmem:[%s7 + $0x408] sm:$0xf]
    %v909 = vld [vmem:[%s7 + $0x40c] sm:$0xff]
    %v910 = vld [vmem:[%s7 + $0x414] sm:$0xff]
    %v911 = vld [vmem:[%s7 + $0x41c] sm:$0xff]
    %v912 = vld [vmem:[%s7 + $0x424] sm:$0xf]
    %v913 = vld [vmem:[%s7 + $0x428] sm:$0xff]
    %v914 = vld [vmem:[%s7 + $0x430] sm:$0xff]
    %v915 = vld [vmem:[%s7 + $0x438] sm:$0xff]
    %v916 = vld [vmem:[%s7 + $0x440] sm:$0xf]
    %v917 = vld [vmem:[%s7 + $0x444] sm:$0xff]
    %v918 = vld [vmem:[%s7 + $0x44c] sm:$0xff]
    %v919 = vld [vmem:[%s7 + $0x454] sm:$0xff]
    %v920 = vld [vmem:[%s7 + $0x45c] sm:$0xf]
    %v921 = vld [vmem:[%s7 + $0x460] sm:$0xff]
    %v922 = vld [vmem:[%s7 + $0x468] sm:$0xff]
    %v923 = vld [vmem:[%s7 + $0x470] sm:$0xff]
    %v924 = vld [vmem:[%s7 + $0x478] sm:$0xf]
    %v925 = vld [vmem:[%s7 + $0x47c] sm:$0xff]
    %v926 = vld [vmem:[%s7 + $0x484] sm:$0xff]
    %v927 = vld [vmem:[%s7 + $0x48c] sm:$0xff]
    %v928 = vld [vmem:[%s7 + $0x494] sm:$0xf]
    %v929 = vld [vmem:[%s7 + $0x498] sm:$0xff]
    %v930 = vld [vmem:[%s7 + $0x4a0] sm:$0xff]
    %v931 = vld [vmem:[%s7 + $0x4a8] sm:$0xff]
    %v932 = vld [vmem:[%s7 + $0x4b0] sm:$0xf]
    %v933 = vld [vmem:[%s7 + $0x4b4] sm:$0xff]
    %v934 = vld [vmem:[%s7 + $0x4bc] sm:$0xff]
    %v935 = vld [vmem:[%s7 + $0x4c4] sm:$0xff]
    %v936 = vld [vmem:[%s7 + $0x4cc] sm:$0xf]
    %v937 = vld [vmem:[%s7 + $0x4d0] sm:$0xff]
    %v938 = vld [vmem:[%s7 + $0x4d8] sm:$0xff]
    %v939 = vld [vmem:[%s7 + $0x4e0] sm:$0xff]
    %v940 = vld [vmem:[%s7 + $0x4e8] sm:$0xf]
    %v941 = vld [vmem:[%s7 + $0x4ec] sm:$0xff]
    %v942 = vld [vmem:[%s7 + $0x4f4] sm:$0xff]
    %v943 = vld [vmem:[%s7 + $0x4fc] sm:$0xff]
    %v944 = vld [vmem:[%s7 + $0x504] sm:$0xf]
    %v945 = vld [vmem:[%s7 + $0x508] sm:$0xff]
    %v946 = vld [vmem:[%s7 + $0x510] sm:$0xff]
    %v947 = vld [vmem:[%s7 + $0x518] sm:$0xff]
    %v948 = vld [vmem:[%s7 + $0x520] sm:$0xf]
    %v949 = vld [vmem:[%s7 + $0x524] sm:$0xff]
    %v950 = vld [vmem:[%s7 + $0x52c] sm:$0xff]
    %v951 = vld [vmem:[%s7 + $0x534] sm:$0xff]
    %v952 = vld [vmem:[%s7 + $0x53c] sm:$0xf]
    %v953 = vld [vmem:[%s7 + $0x540] sm:$0xff]
    %v954 = vld [vmem:[%s7 + $0x548] sm:$0xff]
    %v955 = vld [vmem:[%s7 + $0x550] sm:$0xff]
    %v956 = vld [vmem:[%s7 + $0x558] sm:$0xf]
    %v957 = vld [vmem:[%s7 + $0x55c] sm:$0xff]
    %v958 = vld [vmem:[%s7 + $0x564] sm:$0xff]
    %v959 = vld [vmem:[%s7 + $0x56c] sm:$0xff]
    %v960 = vld [vmem:[%s7 + $0x574] sm:$0xf]
    %v961 = vld [vmem:[%s7 + $0x578] sm:$0xff]
    %v962 = vld [vmem:[%s7 + $0x580] sm:$0xff]
    %v963 = vld [vmem:[%s7 + $0x588] sm:$0xff]
    %v964 = vld [vmem:[%s7 + $0x590] sm:$0xf]
    %v965 = vld [vmem:[%s7 + $0x594] sm:$0xff]
    %v966 = vld [vmem:[%s7 + $0x59c] sm:$0xff]
    %v967 = vld [vmem:[%s7 + $0x5a4] sm:$0xff]
    %v968 = vld [vmem:[%s7 + $0x5ac] sm:$0xf]
    %v969 = vld [vmem:[%s7 + $0x5b0] sm:$0xff]
    %v970 = vld [vmem:[%s7 + $0x5b8] sm:$0xff]
    %v971 = vld [vmem:[%s7 + $0x5c0] sm:$0xff]
    %v972 = vld [vmem:[%s7 + $0x5c8] sm:$0xf]
    %v973 = vld [vmem:[%s7 + $0x5cc] sm:$0xff]
    %v974 = vld [vmem:[%s7 + $0x5d4] sm:$0xff]
    %v975 = vld [vmem:[%s7 + $0x5dc] sm:$0xff]
    %v976 = vld [vmem:[%s7 + $0x5e4] sm:$0xf]
    %v977 = vld [vmem:[%s7 + $0x5e8] sm:$0xff]
    %v978 = vld [vmem:[%s7 + $0x5f0] sm:$0xff]
    %v979 = vld [vmem:[%s7 + $0x5f8] sm:$0xff]
    %v980 = vld [vmem:[%s7 + $0x600] sm:$0xf]
    %v981 = vld [vmem:[%s7 + $0x604] sm:$0xff]
    %v982 = vld [vmem:[%s7 + $0x60c] sm:$0xff]
    %v983 = vld [vmem:[%s7 + $0x614] sm:$0xff]
    %v984 = vld [vmem:[%s7 + $0x61c] sm:$0xf]
    %v985 = vld [vmem:[%s7 + $0x620] sm:$0xff]
    %v986 = vld [vmem:[%s7 + $0x628] sm:$0xff]
    %v987 = vld [vmem:[%s7 + $0x630] sm:$0xff]
    %v988 = vld [vmem:[%s7 + $0x638] sm:$0xf]
    %v989 = vld [vmem:[%s7 + $0x63c] sm:$0xff]
    %v990 = vld [vmem:[%s7 + $0x644] sm:$0xff]
    %v991 = vld [vmem:[%s7 + $0x64c] sm:$0xff]
    %v992 = vld [vmem:[%s7 + $0x654] sm:$0xf]
    %v993 = vld [vmem:[%s7 + $0x658] sm:$0xff]
    %v994 = vld [vmem:[%s7 + $0x660] sm:$0xff]
    %v995 = vld [vmem:[%s7 + $0x668] sm:$0xff]
    %v996 = vld [vmem:[%s7 + $0x670] sm:$0xf]
    %v997 = vld [vmem:[%s7 + $0x674] sm:$0xff]
    %v998 = vld [vmem:[%s7 + $0x67c] sm:$0xff]
    %v999 = vld [vmem:[%s7 + $0x684] sm:$0xff]
    %v1000 = vld [vmem:[%s7 + $0x68c] sm:$0xf]
    %v1001 = vld [vmem:[%s7 + $0x690] sm:$0xff]
    %v1002 = vld [vmem:[%s7 + $0x698] sm:$0xff]
    %v1003 = vld [vmem:[%s7 + $0x6a0] sm:$0xff]
    %v1004 = vld [vmem:[%s7 + $0x6a8] sm:$0xf]
    %v1005 = vld [vmem:[%s7 + $0x6ac] sm:$0xff]
    %v1006 = vld [vmem:[%s7 + $0x6b4] sm:$0xff]
    %v1007 = vld [vmem:[%s7 + $0x6bc] sm:$0xff]
    %v1008 = vld [vmem:[%s7 + $0x6c4] sm:$0xf]
    %v1009 = vld [vmem:[%s7 + $0x6c8] sm:$0xff]
    %v1010 = vld [vmem:[%s7 + $0x6d0] sm:$0xff]
    %v1011 = vld [vmem:[%s7 + $0x6d8] sm:$0xff]
    %v1012 = vld [vmem:[%s7 + $0x6e0] sm:$0xf]
    %v1013 = vld [vmem:[%s7 + $0x6e4] sm:$0xff]
    %v1014 = vld [vmem:[%s7 + $0x6ec] sm:$0xff]
    %v1015 = vld [vmem:[%s7 + $0x6f4] sm:$0xff]
    %v1016 = vld [vmem:[%s7 + $0x6fc] sm:$0xf]
    %v1017 = vld [vmem:[%s8] sm:$0x7f]
    %v1019 = vperm.slane %v1017, 0
    %v1020 = vperm.slane %v1017, 1
    %v1021 = vperm.slane %v1017, 2
    %v1022 = vperm.slane %v1017, 3
    %v1023 = vperm.slane %v1017, 4
    %v1024 = vperm.slane %v1017, 5
    %v1025 = vperm.slane %v1017, 6
    %v1289 = vunpack.c.l.b16 %v761
    %v1290 = vunpack.c.h.b16 %v761
    %v1291 = vunpack.c.l.b16 %v762
    %v1292 = vunpack.c.h.b16 %v762
    %v1293 = vunpack.c.l.b16 %v763
    %v1294 = vunpack.c.h.b16 %v763
    %v1295 = vunpack.c.l.b16 %v764
    %v1296 = vunpack.c.l.b16 %v765
    %v1297 = vunpack.c.h.b16 %v765
    %v1298 = vunpack.c.l.b16 %v766
    %v1299 = vunpack.c.h.b16 %v766
    %v1300 = vunpack.c.l.b16 %v767
    %v1301 = vunpack.c.h.b16 %v767
    %v1302 = vunpack.c.l.b16 %v768
    %v1303 = vunpack.c.l.b16 %v769
    %v1304 = vunpack.c.h.b16 %v769
    %v1305 = vunpack.c.l.b16 %v770
    %v1306 = vunpack.c.h.b16 %v770
    %v1307 = vunpack.c.l.b16 %v771
    %v1308 = vunpack.c.h.b16 %v771
    %v1309 = vunpack.c.l.b16 %v772
    %v1310 = vunpack.c.l.b16 %v773
    %v1311 = vunpack.c.h.b16 %v773
    %v1312 = vunpack.c.l.b16 %v774
    %v1313 = vunpack.c.h.b16 %v774
    %v1314 = vunpack.c.l.b16 %v775
    %v1315 = vunpack.c.h.b16 %v775
    %v1316 = vunpack.c.l.b16 %v776
    %v1317 = vunpack.c.l.b16 %v777
    %v1318 = vunpack.c.h.b16 %v777
    %v1319 = vunpack.c.l.b16 %v778
    %v1320 = vunpack.c.h.b16 %v778
    %v1321 = vunpack.c.l.b16 %v779
    %v1322 = vunpack.c.h.b16 %v779
    %v1323 = vunpack.c.l.b16 %v780
    %v1324 = vunpack.c.l.b16 %v781
    %v1325 = vunpack.c.h.b16 %v781
    %v1326 = vunpack.c.l.b16 %v782
    %v1327 = vunpack.c.h.b16 %v782
    %v1328 = vunpack.c.l.b16 %v783
    %v1329 = vunpack.c.h.b16 %v783
    %v1330 = vunpack.c.l.b16 %v784
    %v1331 = vunpack.c.l.b16 %v785
    %v1332 = vunpack.c.h.b16 %v785
    %v1333 = vunpack.c.l.b16 %v786
    %v1334 = vunpack.c.h.b16 %v786
    %v1335 = vunpack.c.l.b16 %v787
    %v1336 = vunpack.c.h.b16 %v787
    %v1337 = vunpack.c.l.b16 %v788
    %v1338 = vunpack.c.l.b16 %v789
    %v1339 = vunpack.c.h.b16 %v789
    %v1340 = vunpack.c.l.b16 %v790
    %v1341 = vunpack.c.h.b16 %v790
    %v1342 = vunpack.c.l.b16 %v791
    %v1343 = vunpack.c.h.b16 %v791
    %v1344 = vunpack.c.l.b16 %v792
    %v1345 = vunpack.c.l.b16 %v793
    %v1346 = vunpack.c.h.b16 %v793
    %v1347 = vunpack.c.l.b16 %v794
    %v1348 = vunpack.c.h.b16 %v794
    %v1349 = vunpack.c.l.b16 %v795
    %v1350 = vunpack.c.h.b16 %v795
    %v1351 = vunpack.c.l.b16 %v796
    %v1352 = vunpack.c.l.b16 %v797
    %v1353 = vunpack.c.h.b16 %v797
    %v1354 = vunpack.c.l.b16 %v798
    %v1355 = vunpack.c.h.b16 %v798
    %v1356 = vunpack.c.l.b16 %v799
    %v1357 = vunpack.c.h.b16 %v799
    %v1358 = vunpack.c.l.b16 %v800
    %v1359 = vunpack.c.l.b16 %v801
    %v1360 = vunpack.c.h.b16 %v801
    %v1361 = vunpack.c.l.b16 %v802
    %v1362 = vunpack.c.h.b16 %v802
    %v1363 = vunpack.c.l.b16 %v803
    %v1364 = vunpack.c.h.b16 %v803
    %v1365 = vunpack.c.l.b16 %v804
    %v1366 = vunpack.c.l.b16 %v805
    %v1367 = vunpack.c.h.b16 %v805
    %v1368 = vunpack.c.l.b16 %v806
    %v1369 = vunpack.c.h.b16 %v806
    %v1370 = vunpack.c.l.b16 %v807
    %v1371 = vunpack.c.h.b16 %v807
    %v1372 = vunpack.c.l.b16 %v808
    %v1373 = vunpack.c.l.b16 %v809
    %v1374 = vunpack.c.h.b16 %v809
    %v1375 = vunpack.c.l.b16 %v810
    %v1376 = vunpack.c.h.b16 %v810
    %v1377 = vunpack.c.l.b16 %v811
    %v1378 = vunpack.c.h.b16 %v811
    %v1379 = vunpack.c.l.b16 %v812
    %v1380 = vunpack.c.l.b16 %v813
    %v1381 = vunpack.c.h.b16 %v813
    %v1382 = vunpack.c.l.b16 %v814
    %v1383 = vunpack.c.h.b16 %v814
    %v1384 = vunpack.c.l.b16 %v815
    %v1385 = vunpack.c.h.b16 %v815
    %v1386 = vunpack.c.l.b16 %v816
    %v1387 = vunpack.c.l.b16 %v817
    %v1388 = vunpack.c.h.b16 %v817
    %v1389 = vunpack.c.l.b16 %v818
    %v1390 = vunpack.c.h.b16 %v818
    %v1391 = vunpack.c.l.b16 %v819
    %v1392 = vunpack.c.h.b16 %v819
    %v1393 = vunpack.c.l.b16 %v820
    %v1394 = vunpack.c.l.b16 %v821
    %v1395 = vunpack.c.h.b16 %v821
    %v1396 = vunpack.c.l.b16 %v822
    %v1397 = vunpack.c.h.b16 %v822
    %v1398 = vunpack.c.l.b16 %v823
    %v1399 = vunpack.c.h.b16 %v823
    %v1400 = vunpack.c.l.b16 %v824
    %v1401 = vunpack.c.l.b16 %v825
    %v1402 = vunpack.c.h.b16 %v825
    %v1403 = vunpack.c.l.b16 %v826
    %v1404 = vunpack.c.h.b16 %v826
    %v1405 = vunpack.c.l.b16 %v827
    %v1406 = vunpack.c.h.b16 %v827
    %v1407 = vunpack.c.l.b16 %v828
    %v1408 = vunpack.c.l.b16 %v829
    %v1409 = vunpack.c.h.b16 %v829
    %v1410 = vunpack.c.l.b16 %v830
    %v1411 = vunpack.c.h.b16 %v830
    %v1412 = vunpack.c.l.b16 %v831
    %v1413 = vunpack.c.h.b16 %v831
    %v1414 = vunpack.c.l.b16 %v832
    %v1415 = vunpack.c.l.b16 %v833
    %v1416 = vunpack.c.h.b16 %v833
    %v1417 = vunpack.c.l.b16 %v834
    %v1418 = vunpack.c.h.b16 %v834
    %v1419 = vunpack.c.l.b16 %v835
    %v1420 = vunpack.c.h.b16 %v835
    %v1421 = vunpack.c.l.b16 %v836
    %v1422 = vunpack.c.l.b16 %v837
    %v1423 = vunpack.c.h.b16 %v837
    %v1424 = vunpack.c.l.b16 %v838
    %v1425 = vunpack.c.h.b16 %v838
    %v1426 = vunpack.c.l.b16 %v839
    %v1427 = vunpack.c.h.b16 %v839
    %v1428 = vunpack.c.l.b16 %v840
    %v1429 = vunpack.c.l.b16 %v841
    %v1430 = vunpack.c.h.b16 %v841
    %v1431 = vunpack.c.l.b16 %v842
    %v1432 = vunpack.c.h.b16 %v842
    %v1433 = vunpack.c.l.b16 %v843
    %v1434 = vunpack.c.h.b16 %v843
    %v1435 = vunpack.c.l.b16 %v844
    %v1436 = vunpack.c.l.b16 %v845
    %v1437 = vunpack.c.h.b16 %v845
    %v1438 = vunpack.c.l.b16 %v846
    %v1439 = vunpack.c.h.b16 %v846
    %v1440 = vunpack.c.l.b16 %v847
    %v1441 = vunpack.c.h.b16 %v847
    %v1442 = vunpack.c.l.b16 %v848
    %v1443 = vunpack.c.l.b16 %v849
    %v1444 = vunpack.c.h.b16 %v849
    %v1445 = vunpack.c.l.b16 %v850
    %v1446 = vunpack.c.h.b16 %v850
    %v1447 = vunpack.c.l.b16 %v851
    %v1448 = vunpack.c.h.b16 %v851
    %v1449 = vunpack.c.l.b16 %v852
    %v1450 = vunpack.c.l.b16 %v853
    %v1451 = vunpack.c.h.b16 %v853
    %v1452 = vunpack.c.l.b16 %v854
    %v1453 = vunpack.c.h.b16 %v854
    %v1454 = vunpack.c.l.b16 %v855
    %v1455 = vunpack.c.h.b16 %v855
    %v1456 = vunpack.c.l.b16 %v856
    %v1457 = vunpack.c.l.b16 %v857
    %v1458 = vunpack.c.h.b16 %v857
    %v1459 = vunpack.c.l.b16 %v858
    %v1460 = vunpack.c.h.b16 %v858
    %v1461 = vunpack.c.l.b16 %v859
    %v1462 = vunpack.c.h.b16 %v859
    %v1463 = vunpack.c.l.b16 %v860
    %v1464 = vunpack.c.l.b16 %v861
    %v1465 = vunpack.c.h.b16 %v861
    %v1466 = vunpack.c.l.b16 %v862
    %v1467 = vunpack.c.h.b16 %v862
    %v1468 = vunpack.c.l.b16 %v863
    %v1469 = vunpack.c.h.b16 %v863
    %v1470 = vunpack.c.l.b16 %v864
    %v1471 = vunpack.c.l.b16 %v865
    %v1472 = vunpack.c.h.b16 %v865
    %v1473 = vunpack.c.l.b16 %v866
    %v1474 = vunpack.c.h.b16 %v866
    %v1475 = vunpack.c.l.b16 %v867
    %v1476 = vunpack.c.h.b16 %v867
    %v1477 = vunpack.c.l.b16 %v868
    %v1478 = vunpack.c.l.b16 %v869
    %v1479 = vunpack.c.h.b16 %v869
    %v1480 = vunpack.c.l.b16 %v870
    %v1481 = vunpack.c.h.b16 %v870
    %v1482 = vunpack.c.l.b16 %v871
    %v1483 = vunpack.c.h.b16 %v871
    %v1484 = vunpack.c.l.b16 %v872
    %v1485 = vunpack.c.l.b16 %v873
    %v1486 = vunpack.c.h.b16 %v873
    %v1487 = vunpack.c.l.b16 %v874
    %v1488 = vunpack.c.h.b16 %v874
    %v1489 = vunpack.c.l.b16 %v875
    %v1490 = vunpack.c.h.b16 %v875
    %v1491 = vunpack.c.l.b16 %v876
    %v1492 = vunpack.c.l.b16 %v877
    %v1493 = vunpack.c.h.b16 %v877
    %v1494 = vunpack.c.l.b16 %v878
    %v1495 = vunpack.c.h.b16 %v878
    %v1496 = vunpack.c.l.b16 %v879
    %v1497 = vunpack.c.h.b16 %v879
    %v1498 = vunpack.c.l.b16 %v880
    %v1499 = vunpack.c.l.b16 %v881
    %v1500 = vunpack.c.h.b16 %v881
    %v1501 = vunpack.c.l.b16 %v882
    %v1502 = vunpack.c.h.b16 %v882
    %v1503 = vunpack.c.l.b16 %v883
    %v1504 = vunpack.c.h.b16 %v883
    %v1505 = vunpack.c.l.b16 %v884
    %v1506 = vunpack.c.l.b16 %v885
    %v1507 = vunpack.c.h.b16 %v885
    %v1508 = vunpack.c.l.b16 %v886
    %v1509 = vunpack.c.h.b16 %v886
    %v1510 = vunpack.c.l.b16 %v887
    %v1511 = vunpack.c.h.b16 %v887
    %v1512 = vunpack.c.l.b16 %v888
    %v1513 = vunpack.c.l.b16 %v889
    %v1514 = vunpack.c.h.b16 %v889
    %v1515 = vunpack.c.l.b16 %v890
    %v1516 = vunpack.c.h.b16 %v890
    %v1517 = vunpack.c.l.b16 %v891
    %v1518 = vunpack.c.h.b16 %v891
    %v1519 = vunpack.c.l.b16 %v892
    %v1520 = vunpack.c.l.b16 %v893
    %v1521 = vunpack.c.h.b16 %v893
    %v1522 = vunpack.c.l.b16 %v894
    %v1523 = vunpack.c.h.b16 %v894
    %v1524 = vunpack.c.l.b16 %v895
    %v1525 = vunpack.c.h.b16 %v895
    %v1526 = vunpack.c.l.b16 %v896
    %v1527 = vunpack.c.l.b16 %v897
    %v1528 = vunpack.c.h.b16 %v897
    %v1529 = vunpack.c.l.b16 %v898
    %v1530 = vunpack.c.h.b16 %v898
    %v1531 = vunpack.c.l.b16 %v899
    %v1532 = vunpack.c.h.b16 %v899
    %v1533 = vunpack.c.l.b16 %v900
    %v1534 = vunpack.c.l.b16 %v901
    %v1535 = vunpack.c.h.b16 %v901
    %v1536 = vunpack.c.l.b16 %v902
    %v1537 = vunpack.c.h.b16 %v902
    %v1538 = vunpack.c.l.b16 %v903
    %v1539 = vunpack.c.h.b16 %v903
    %v1540 = vunpack.c.l.b16 %v904
    %v1541 = vunpack.c.l.b16 %v905
    %v1542 = vunpack.c.h.b16 %v905
    %v1543 = vunpack.c.l.b16 %v906
    %v1544 = vunpack.c.h.b16 %v906
    %v1545 = vunpack.c.l.b16 %v907
    %v1546 = vunpack.c.h.b16 %v907
    %v1547 = vunpack.c.l.b16 %v908
    %v1548 = vunpack.c.l.b16 %v909
    %v1549 = vunpack.c.h.b16 %v909
    %v1550 = vunpack.c.l.b16 %v910
    %v1551 = vunpack.c.h.b16 %v910
    %v1552 = vunpack.c.l.b16 %v911
    %v1553 = vunpack.c.h.b16 %v911
    %v1554 = vunpack.c.l.b16 %v912
    %v1555 = vunpack.c.l.b16 %v913
    %v1556 = vunpack.c.h.b16 %v913
    %v1557 = vunpack.c.l.b16 %v914
    %v1558 = vunpack.c.h.b16 %v914
    %v1559 = vunpack.c.l.b16 %v915
    %v1560 = vunpack.c.h.b16 %v915
    %v1561 = vunpack.c.l.b16 %v916
    %v1562 = vunpack.c.l.b16 %v917
    %v1563 = vunpack.c.h.b16 %v917
    %v1564 = vunpack.c.l.b16 %v918
    %v1565 = vunpack.c.h.b16 %v918
    %v1566 = vunpack.c.l.b16 %v919
    %v1567 = vunpack.c.h.b16 %v919
    %v1568 = vunpack.c.l.b16 %v920
    %v1569 = vunpack.c.l.b16 %v921
    %v1570 = vunpack.c.h.b16 %v921
    %v1571 = vunpack.c.l.b16 %v922
    %v1572 = vunpack.c.h.b16 %v922
    %v1573 = vunpack.c.l.b16 %v923
    %v1574 = vunpack.c.h.b16 %v923
    %v1575 = vunpack.c.l.b16 %v924
    %v1576 = vunpack.c.l.b16 %v925
    %v1577 = vunpack.c.h.b16 %v925
    %v1578 = vunpack.c.l.b16 %v926
    %v1579 = vunpack.c.h.b16 %v926
    %v1580 = vunpack.c.l.b16 %v927
    %v1581 = vunpack.c.h.b16 %v927
    %v1582 = vunpack.c.l.b16 %v928
    %v1583 = vunpack.c.l.b16 %v929
    %v1584 = vunpack.c.h.b16 %v929
    %v1585 = vunpack.c.l.b16 %v930
    %v1586 = vunpack.c.h.b16 %v930
    %v1587 = vunpack.c.l.b16 %v931
    %v1588 = vunpack.c.h.b16 %v931
    %v1589 = vunpack.c.l.b16 %v932
    %v1590 = vunpack.c.l.b16 %v933
    %v1591 = vunpack.c.h.b16 %v933
    %v1592 = vunpack.c.l.b16 %v934
    %v1593 = vunpack.c.h.b16 %v934
    %v1594 = vunpack.c.l.b16 %v935
    %v1595 = vunpack.c.h.b16 %v935
    %v1596 = vunpack.c.l.b16 %v936
    %v1597 = vunpack.c.l.b16 %v937
    %v1598 = vunpack.c.h.b16 %v937
    %v1599 = vunpack.c.l.b16 %v938
    %v1600 = vunpack.c.h.b16 %v938
    %v1601 = vunpack.c.l.b16 %v939
    %v1602 = vunpack.c.h.b16 %v939
    %v1603 = vunpack.c.l.b16 %v940
    %v1604 = vunpack.c.l.b16 %v941
    %v1605 = vunpack.c.h.b16 %v941
    %v1606 = vunpack.c.l.b16 %v942
    %v1607 = vunpack.c.h.b16 %v942
    %v1608 = vunpack.c.l.b16 %v943
    %v1609 = vunpack.c.h.b16 %v943
    %v1610 = vunpack.c.l.b16 %v944
    %v1611 = vunpack.c.l.b16 %v945
    %v1612 = vunpack.c.h.b16 %v945
    %v1613 = vunpack.c.l.b16 %v946
    %v1614 = vunpack.c.h.b16 %v946
    %v1615 = vunpack.c.l.b16 %v947
    %v1616 = vunpack.c.h.b16 %v947
    %v1617 = vunpack.c.l.b16 %v948
    %v1618 = vunpack.c.l.b16 %v949
    %v1619 = vunpack.c.h.b16 %v949
    %v1620 = vunpack.c.l.b16 %v950
    %v1621 = vunpack.c.h.b16 %v950
    %v1622 = vunpack.c.l.b16 %v951
    %v1623 = vunpack.c.h.b16 %v951
    %v1624 = vunpack.c.l.b16 %v952
    %v1625 = vunpack.c.l.b16 %v953
    %v1626 = vunpack.c.h.b16 %v953
    %v1627 = vunpack.c.l.b16 %v954
    %v1628 = vunpack.c.h.b16 %v954
    %v1629 = vunpack.c.l.b16 %v955
    %v1630 = vunpack.c.h.b16 %v955
    %v1631 = vunpack.c.l.b16 %v956
    %v1632 = vunpack.c.l.b16 %v957
    %v1633 = vunpack.c.h.b16 %v957
    %v1634 = vunpack.c.l.b16 %v958
    %v1635 = vunpack.c.h.b16 %v958
    %v1636 = vunpack.c.l.b16 %v959
    %v1637 = vunpack.c.h.b16 %v959
    %v1638 = vunpack.c.l.b16 %v960
    %v1639 = vunpack.c.l.b16 %v961
    %v1640 = vunpack.c.h.b16 %v961
    %v1641 = vunpack.c.l.b16 %v962
    %v1642 = vunpack.c.h.b16 %v962
    %v1643 = vunpack.c.l.b16 %v963
    %v1644 = vunpack.c.h.b16 %v963
    %v1645 = vunpack.c.l.b16 %v964
    %v1646 = vunpack.c.l.b16 %v965
    %v1647 = vunpack.c.h.b16 %v965
    %v1648 = vunpack.c.l.b16 %v966
    %v1649 = vunpack.c.h.b16 %v966
    %v1650 = vunpack.c.l.b16 %v967
    %v1651 = vunpack.c.h.b16 %v967
    %v1652 = vunpack.c.l.b16 %v968
    %v1653 = vunpack.c.l.b16 %v969
    %v1654 = vunpack.c.h.b16 %v969
    %v1655 = vunpack.c.l.b16 %v970
    %v1656 = vunpack.c.h.b16 %v970
    %v1657 = vunpack.c.l.b16 %v971
    %v1658 = vunpack.c.h.b16 %v971
    %v1659 = vunpack.c.l.b16 %v972
    %v1660 = vunpack.c.l.b16 %v973
    %v1661 = vunpack.c.h.b16 %v973
    %v1662 = vunpack.c.l.b16 %v974
    %v1663 = vunpack.c.h.b16 %v974
    %v1664 = vunpack.c.l.b16 %v975
    %v1665 = vunpack.c.h.b16 %v975
    %v1666 = vunpack.c.l.b16 %v976
    %v1667 = vunpack.c.l.b16 %v977
    %v1668 = vunpack.c.h.b16 %v977
    %v1669 = vunpack.c.l.b16 %v978
    %v1670 = vunpack.c.h.b16 %v978
    %v1671 = vunpack.c.l.b16 %v979
    %v1672 = vunpack.c.h.b16 %v979
    %v1673 = vunpack.c.l.b16 %v980
    %v1674 = vunpack.c.l.b16 %v981
    %v1675 = vunpack.c.h.b16 %v981
    %v1676 = vunpack.c.l.b16 %v982
    %v1677 = vunpack.c.h.b16 %v982
    %v1678 = vunpack.c.l.b16 %v983
    %v1679 = vunpack.c.h.b16 %v983
    %v1680 = vunpack.c.l.b16 %v984
    %v1681 = vunpack.c.l.b16 %v985
    %v1682 = vunpack.c.h.b16 %v985
    %v1683 = vunpack.c.l.b16 %v986
    %v1684 = vunpack.c.h.b16 %v986
    %v1685 = vunpack.c.l.b16 %v987
    %v1686 = vunpack.c.h.b16 %v987
    %v1687 = vunpack.c.l.b16 %v988
    %v1688 = vunpack.c.l.b16 %v989
    %v1689 = vunpack.c.h.b16 %v989
    %v1690 = vunpack.c.l.b16 %v990
    %v1691 = vunpack.c.h.b16 %v990
    %v1692 = vunpack.c.l.b16 %v991
    %v1693 = vunpack.c.h.b16 %v991
    %v1694 = vunpack.c.l.b16 %v992
    %v1695 = vunpack.c.l.b16 %v993
    %v1696 = vunpack.c.h.b16 %v993
    %v1697 = vunpack.c.l.b16 %v994
    %v1698 = vunpack.c.h.b16 %v994
    %v1699 = vunpack.c.l.b16 %v995
    %v1700 = vunpack.c.h.b16 %v995
    %v1701 = vunpack.c.l.b16 %v996
    %v1702 = vunpack.c.l.b16 %v997
    %v1703 = vunpack.c.h.b16 %v997
    %v1704 = vunpack.c.l.b16 %v998
    %v1705 = vunpack.c.h.b16 %v998
    %v1706 = vunpack.c.l.b16 %v999
    %v1707 = vunpack.c.h.b16 %v999
    %v1708 = vunpack.c.l.b16 %v1000
    %v1709 = vunpack.c.l.b16 %v1001
    %v1710 = vunpack.c.h.b16 %v1001
    %v1711 = vunpack.c.l.b16 %v1002
    %v1712 = vunpack.c.h.b16 %v1002
    %v1713 = vunpack.c.l.b16 %v1003
    %v1714 = vunpack.c.h.b16 %v1003
    %v1715 = vunpack.c.l.b16 %v1004
    %v1716 = vunpack.c.l.b16 %v1005
    %v1717 = vunpack.c.h.b16 %v1005
    %v1718 = vunpack.c.l.b16 %v1006
    %v1719 = vunpack.c.h.b16 %v1006
    %v1720 = vunpack.c.l.b16 %v1007
    %v1721 = vunpack.c.h.b16 %v1007
    %v1722 = vunpack.c.l.b16 %v1008
    %v1723 = vunpack.c.l.b16 %v1009
    %v1724 = vunpack.c.h.b16 %v1009
    %v1725 = vunpack.c.l.b16 %v1010
    %v1726 = vunpack.c.h.b16 %v1010
    %v1727 = vunpack.c.l.b16 %v1011
    %v1728 = vunpack.c.h.b16 %v1011
    %v1729 = vunpack.c.l.b16 %v1012
    %v1730 = vunpack.c.l.b16 %v1013
    %v1731 = vunpack.c.h.b16 %v1013
    %v1732 = vunpack.c.l.b16 %v1014
    %v1733 = vunpack.c.h.b16 %v1014
    %v1734 = vunpack.c.l.b16 %v1015
    %v1735 = vunpack.c.h.b16 %v1015
    %v1736 = vunpack.c.l.b16 %v1016
    %v1737 = vpack.c.b16 %v1296, %v1289
    %v1738 = vpack.c.b16 %v1297, %v1290
    %v1739 = vpack.c.b16 %v1298, %v1291
    %v1740 = vpack.c.b16 %v1299, %v1292
    %v1741 = vpack.c.b16 %v1300, %v1293
    %v1742 = vpack.c.b16 %v1301, %v1294
    %v1743 = vpack.c.b16 %v1302, %v1295
    %v1744 = vpack.c.b16 %v1310, %v1303
    %v1745 = vpack.c.b16 %v1311, %v1304
    %v1746 = vpack.c.b16 %v1312, %v1305
    %v1747 = vpack.c.b16 %v1313, %v1306
    %v1748 = vpack.c.b16 %v1314, %v1307
    %v1749 = vpack.c.b16 %v1315, %v1308
    %v1750 = vpack.c.b16 %v1316, %v1309
    %v1751 = vpack.c.b16 %v1324, %v1317
    %v1752 = vpack.c.b16 %v1325, %v1318
    %v1753 = vpack.c.b16 %v1326, %v1319
    %v1754 = vpack.c.b16 %v1327, %v1320
    %v1755 = vpack.c.b16 %v1328, %v1321
    %v1756 = vpack.c.b16 %v1329, %v1322
    %v1757 = vpack.c.b16 %v1330, %v1323
    %v1758 = vpack.c.b16 %v1338, %v1331
    %v1759 = vpack.c.b16 %v1339, %v1332
    %v1760 = vpack.c.b16 %v1340, %v1333
    %v1761 = vpack.c.b16 %v1341, %v1334
    %v1762 = vpack.c.b16 %v1342, %v1335
    %v1763 = vpack.c.b16 %v1343, %v1336
    %v1764 = vpack.c.b16 %v1344, %v1337
    %v1765 = vpack.c.b16 %v1352, %v1345
    %v1766 = vpack.c.b16 %v1353, %v1346
    %v1767 = vpack.c.b16 %v1354, %v1347
    %v1768 = vpack.c.b16 %v1355, %v1348
    %v1769 = vpack.c.b16 %v1356, %v1349
    %v1770 = vpack.c.b16 %v1357, %v1350
    %v1771 = vpack.c.b16 %v1358, %v1351
    %v1772 = vpack.c.b16 %v1366, %v1359
    %v1773 = vpack.c.b16 %v1367, %v1360
    %v1774 = vpack.c.b16 %v1368, %v1361
    %v1775 = vpack.c.b16 %v1369, %v1362
    %v1776 = vpack.c.b16 %v1370, %v1363
    %v1777 = vpack.c.b16 %v1371, %v1364
    %v1778 = vpack.c.b16 %v1372, %v1365
    %v1779 = vpack.c.b16 %v1380, %v1373
    %v1780 = vpack.c.b16 %v1381, %v1374
    %v1781 = vpack.c.b16 %v1382, %v1375
    %v1782 = vpack.c.b16 %v1383, %v1376
    %v1783 = vpack.c.b16 %v1384, %v1377
    %v1784 = vpack.c.b16 %v1385, %v1378
    %v1785 = vpack.c.b16 %v1386, %v1379
    %v1786 = vpack.c.b16 %v1394, %v1387
    %v1787 = vpack.c.b16 %v1395, %v1388
    %v1788 = vpack.c.b16 %v1396, %v1389
    %v1789 = vpack.c.b16 %v1397, %v1390
    %v1790 = vpack.c.b16 %v1398, %v1391
    %v1791 = vpack.c.b16 %v1399, %v1392
    %v1792 = vpack.c.b16 %v1400, %v1393
    %v1793 = vpack.c.b16 %v1408, %v1401
    %v1794 = vpack.c.b16 %v1409, %v1402
    %v1795 = vpack.c.b16 %v1410, %v1403
    %v1796 = vpack.c.b16 %v1411, %v1404
    %v1797 = vpack.c.b16 %v1412, %v1405
    %v1798 = vpack.c.b16 %v1413, %v1406
    %v1799 = vpack.c.b16 %v1414, %v1407
    %v1800 = vpack.c.b16 %v1422, %v1415
    %v1801 = vpack.c.b16 %v1423, %v1416
    %v1802 = vpack.c.b16 %v1424, %v1417
    %v1803 = vpack.c.b16 %v1425, %v1418
    %v1804 = vpack.c.b16 %v1426, %v1419
    %v1805 = vpack.c.b16 %v1427, %v1420
    %v1806 = vpack.c.b16 %v1428, %v1421
    %v1807 = vpack.c.b16 %v1436, %v1429
    %v1808 = vpack.c.b16 %v1437, %v1430
    %v1809 = vpack.c.b16 %v1438, %v1431
    %v1810 = vpack.c.b16 %v1439, %v1432
    %v1811 = vpack.c.b16 %v1440, %v1433
    %v1812 = vpack.c.b16 %v1441, %v1434
    %v1813 = vpack.c.b16 %v1442, %v1435
    %v1814 = vpack.c.b16 %v1450, %v1443
    %v1815 = vpack.c.b16 %v1451, %v1444
    %v1816 = vpack.c.b16 %v1452, %v1445
    %v1817 = vpack.c.b16 %v1453, %v1446
    %v1818 = vpack.c.b16 %v1454, %v1447
    %v1819 = vpack.c.b16 %v1455, %v1448
    %v1820 = vpack.c.b16 %v1456, %v1449
    %v1821 = vpack.c.b16 %v1464, %v1457
    %v1822 = vpack.c.b16 %v1465, %v1458
    %v1823 = vpack.c.b16 %v1466, %v1459
    %v1824 = vpack.c.b16 %v1467, %v1460
    %v1825 = vpack.c.b16 %v1468, %v1461
    %v1826 = vpack.c.b16 %v1469, %v1462
    %v1827 = vpack.c.b16 %v1470, %v1463
    %v1828 = vpack.c.b16 %v1478, %v1471
    %v1829 = vpack.c.b16 %v1479, %v1472
    %v1830 = vpack.c.b16 %v1480, %v1473
    %v1831 = vpack.c.b16 %v1481, %v1474
    %v1832 = vpack.c.b16 %v1482, %v1475
    %v1833 = vpack.c.b16 %v1483, %v1476
    %v1834 = vpack.c.b16 %v1484, %v1477
    %v1835 = vpack.c.b16 %v1492, %v1485
    %v1836 = vpack.c.b16 %v1493, %v1486
    %v1837 = vpack.c.b16 %v1494, %v1487
    %v1838 = vpack.c.b16 %v1495, %v1488
    %v1839 = vpack.c.b16 %v1496, %v1489
    %v1840 = vpack.c.b16 %v1497, %v1490
    %v1841 = vpack.c.b16 %v1498, %v1491
    %v1842 = vpack.c.b16 %v1506, %v1499
    %v1843 = vpack.c.b16 %v1507, %v1500
    %v1844 = vpack.c.b16 %v1508, %v1501
    %v1845 = vpack.c.b16 %v1509, %v1502
    %v1846 = vpack.c.b16 %v1510, %v1503
    %v1847 = vpack.c.b16 %v1511, %v1504
    %v1848 = vpack.c.b16 %v1512, %v1505
    %v1849 = vpack.c.b16 %v1520, %v1513
    %v1850 = vpack.c.b16 %v1521, %v1514
    %v1851 = vpack.c.b16 %v1522, %v1515
    %v1852 = vpack.c.b16 %v1523, %v1516
    %v1853 = vpack.c.b16 %v1524, %v1517
    %v1854 = vpack.c.b16 %v1525, %v1518
    %v1855 = vpack.c.b16 %v1526, %v1519
    %v1856 = vpack.c.b16 %v1534, %v1527
    %v1857 = vpack.c.b16 %v1535, %v1528
    %v1858 = vpack.c.b16 %v1536, %v1529
    %v1859 = vpack.c.b16 %v1537, %v1530
    %v1860 = vpack.c.b16 %v1538, %v1531
    %v1861 = vpack.c.b16 %v1539, %v1532
    %v1862 = vpack.c.b16 %v1540, %v1533
    %v1863 = vpack.c.b16 %v1548, %v1541
    %v1864 = vpack.c.b16 %v1549, %v1542
    %v1865 = vpack.c.b16 %v1550, %v1543
    %v1866 = vpack.c.b16 %v1551, %v1544
    %v1867 = vpack.c.b16 %v1552, %v1545
    %v1868 = vpack.c.b16 %v1553, %v1546
    %v1869 = vpack.c.b16 %v1554, %v1547
    %v1870 = vpack.c.b16 %v1562, %v1555
    %v1871 = vpack.c.b16 %v1563, %v1556
    %v1872 = vpack.c.b16 %v1564, %v1557
    %v1873 = vpack.c.b16 %v1565, %v1558
    %v1874 = vpack.c.b16 %v1566, %v1559
    %v1875 = vpack.c.b16 %v1567, %v1560
    %v1876 = vpack.c.b16 %v1568, %v1561
    %v1877 = vpack.c.b16 %v1576, %v1569
    %v1878 = vpack.c.b16 %v1577, %v1570
    %v1879 = vpack.c.b16 %v1578, %v1571
    %v1880 = vpack.c.b16 %v1579, %v1572
    %v1881 = vpack.c.b16 %v1580, %v1573
    %v1882 = vpack.c.b16 %v1581, %v1574
    %v1883 = vpack.c.b16 %v1582, %v1575
    %v1884 = vpack.c.b16 %v1590, %v1583
    %v1885 = vpack.c.b16 %v1591, %v1584
    %v1886 = vpack.c.b16 %v1592, %v1585
    %v1887 = vpack.c.b16 %v1593, %v1586
    %v1888 = vpack.c.b16 %v1594, %v1587
    %v1889 = vpack.c.b16 %v1595, %v1588
    %v1890 = vpack.c.b16 %v1596, %v1589
    %v1891 = vpack.c.b16 %v1604, %v1597
    %v1892 = vpack.c.b16 %v1605, %v1598
    %v1893 = vpack.c.b16 %v1606, %v1599
    %v1894 = vpack.c.b16 %v1607, %v1600
    %v1895 = vpack.c.b16 %v1608, %v1601
    %v1896 = vpack.c.b16 %v1609, %v1602
    %v1897 = vpack.c.b16 %v1610, %v1603
    %v1898 = vpack.c.b16 %v1618, %v1611
    %v1899 = vpack.c.b16 %v1619, %v1612
    %v1900 = vpack.c.b16 %v1620, %v1613
    %v1901 = vpack.c.b16 %v1621, %v1614
    %v1902 = vpack.c.b16 %v1622, %v1615
    %v1903 = vpack.c.b16 %v1623, %v1616
    %v1904 = vpack.c.b16 %v1624, %v1617
    %v1905 = vpack.c.b16 %v1632, %v1625
    %v1906 = vpack.c.b16 %v1633, %v1626
    %v1907 = vpack.c.b16 %v1634, %v1627
    %v1908 = vpack.c.b16 %v1635, %v1628
    %v1909 = vpack.c.b16 %v1636, %v1629
    %v1910 = vpack.c.b16 %v1637, %v1630
    %v1911 = vpack.c.b16 %v1638, %v1631
    %v1912 = vpack.c.b16 %v1646, %v1639
    %v1913 = vpack.c.b16 %v1647, %v1640
    %v1914 = vpack.c.b16 %v1648, %v1641
    %v1915 = vpack.c.b16 %v1649, %v1642
    %v1916 = vpack.c.b16 %v1650, %v1643
    %v1917 = vpack.c.b16 %v1651, %v1644
    %v1918 = vpack.c.b16 %v1652, %v1645
    %v1919 = vpack.c.b16 %v1660, %v1653
    %v1920 = vpack.c.b16 %v1661, %v1654
    %v1921 = vpack.c.b16 %v1662, %v1655
    %v1922 = vpack.c.b16 %v1663, %v1656
    %v1923 = vpack.c.b16 %v1664, %v1657
    %v1924 = vpack.c.b16 %v1665, %v1658
    %v1925 = vpack.c.b16 %v1666, %v1659
    %v1926 = vpack.c.b16 %v1674, %v1667
    %v1927 = vpack.c.b16 %v1675, %v1668
    %v1928 = vpack.c.b16 %v1676, %v1669
    %v1929 = vpack.c.b16 %v1677, %v1670
    %v1930 = vpack.c.b16 %v1678, %v1671
    %v1931 = vpack.c.b16 %v1679, %v1672
    %v1932 = vpack.c.b16 %v1680, %v1673
    %v1933 = vpack.c.b16 %v1688, %v1681
    %v1934 = vpack.c.b16 %v1689, %v1682
    %v1935 = vpack.c.b16 %v1690, %v1683
    %v1936 = vpack.c.b16 %v1691, %v1684
    %v1937 = vpack.c.b16 %v1692, %v1685
    %v1938 = vpack.c.b16 %v1693, %v1686
    %v1939 = vpack.c.b16 %v1694, %v1687
    %v1940 = vpack.c.b16 %v1702, %v1695
    %v1941 = vpack.c.b16 %v1703, %v1696
    %v1942 = vpack.c.b16 %v1704, %v1697
    %v1943 = vpack.c.b16 %v1705, %v1698
    %v1944 = vpack.c.b16 %v1706, %v1699
    %v1945 = vpack.c.b16 %v1707, %v1700
    %v1946 = vpack.c.b16 %v1708, %v1701
    %v1947 = vpack.c.b16 %v1716, %v1709
    %v1948 = vpack.c.b16 %v1717, %v1710
    %v1949 = vpack.c.b16 %v1718, %v1711
    %v1950 = vpack.c.b16 %v1719, %v1712
    %v1951 = vpack.c.b16 %v1720, %v1713
    %v1952 = vpack.c.b16 %v1721, %v1714
    %v1953 = vpack.c.b16 %v1722, %v1715
    %v1954 = vpack.c.b16 %v1730, %v1723
    %v1955 = vpack.c.b16 %v1731, %v1724
    %v1956 = vpack.c.b16 %v1732, %v1725
    %v1957 = vpack.c.b16 %v1733, %v1726
    %v1958 = vpack.c.b16 %v1734, %v1727
    %v1959 = vpack.c.b16 %v1735, %v1728
    %v1960 = vpack.c.b16 %v1736, %v1729
    %2185 = vmatpush.bf16.msra.mxu0 %v1786
    %2186 = vmatpush.bf16.msra.mxu0 %v1779
    %2187 = vmatpush.bf16.msra.mxu0 %v1772
    %2188 = vmatpush.bf16.msra.mxu0 %v1765
    %2189 = vmatpush.bf16.msra.mxu0 %v1758
    %2190 = vmatpush.bf16.msra.mxu0 %v1751
    %2191 = vmatpush.bf16.msra.mxu0 %v1744
    %2192 = vmatpush.bf16.msra.mxu0 %v1737
    %2193 = vmatmul.bf16.gmra.mxu0 %v757
    %v2194 = vpop.f32.mrf.mxu0
    %v2195 = vadd.f32 %v1019, %v2194
    %v2196 = vpop.f32.mrf.mxu0
    %2197 = vdwg.mxu0
    %2198 = vmatpush.bf16.msra.mxu0 %v1842
    %2199 = vmatpush.bf16.msra.mxu0 %v1835
    %2200 = vmatpush.bf16.msra.mxu0 %v1828
    %2201 = vmatpush.bf16.msra.mxu0 %v1821
    %2202 = vmatpush.bf16.msra.mxu0 %v1814
    %2203 = vmatpush.bf16.msra.mxu0 %v1807
    %2204 = vmatpush.bf16.msra.mxu0 %v1800
    %2205 = vmatpush.bf16.msra.mxu0 %v1793
    %2206 = vmatmul.bf16.gmra.mxu0 %v758
    %v2207 = vpop.f32.mrf.mxu0
    %v2208 = vadd.f32 %v2195, %v2207
    %v2209 = vpop.f32.mrf.mxu0
    %2210 = vdwg.mxu0
    %2211 = vmatpush.bf16.msra.mxu0 %v1898
    %2212 = vmatpush.bf16.msra.mxu0 %v1891
    %2213 = vmatpush.bf16.msra.mxu0 %v1884
    %2214 = vmatpush.bf16.msra.mxu0 %v1877
    %2215 = vmatpush.bf16.msra.mxu0 %v1870
    %2216 = vmatpush.bf16.msra.mxu0 %v1863
    %2217 = vmatpush.bf16.msra.mxu0 %v1856
    %2218 = vmatpush.bf16.msra.mxu0 %v1849
    %2219 = vmatmul.bf16.gmra.mxu0 %v759
    %v2220 = vpop.f32.mrf.mxu0
    %v2221 = vadd.f32 %v2208, %v2220
    %v2222 = vpop.f32.mrf.mxu0
    %2223 = vdwg.mxu0
    %2224 = vmatpush.bf16.msra.mxu0 %v1954
    %2225 = vmatpush.bf16.msra.mxu0 %v1947
    %2226 = vmatpush.bf16.msra.mxu0 %v1940
    %2227 = vmatpush.bf16.msra.mxu0 %v1933
    %2228 = vmatpush.bf16.msra.mxu0 %v1926
    %2229 = vmatpush.bf16.msra.mxu0 %v1919
    %2230 = vmatpush.bf16.msra.mxu0 %v1912
    %2231 = vmatpush.bf16.msra.mxu0 %v1905
    %2232 = vmatmul.bf16.gmra.mxu0 %v760
    %v2233 = vpop.f32.mrf.mxu0
    %v2234 = vadd.f32 %v2221, %v2233
    %v2235 = vpop.f32.mrf.mxu0
    %2236 = vdwg.mxu0
    %2237 = vmatpush.bf16.msra.mxu0 %v1787
    %2238 = vmatpush.bf16.msra.mxu0 %v1780
    %2239 = vmatpush.bf16.msra.mxu0 %v1773
    %2240 = vmatpush.bf16.msra.mxu0 %v1766
    %2241 = vmatpush.bf16.msra.mxu0 %v1759
    %2242 = vmatpush.bf16.msra.mxu0 %v1752
    %2243 = vmatpush.bf16.msra.mxu0 %v1745
    %2244 = vmatpush.bf16.msra.mxu0 %v1738
    %2245 = vmatmul.bf16.gmra.mxu0 %v757
    %v2246 = vpop.f32.mrf.mxu0
    %v2247 = vadd.f32 %v1020, %v2246
    %v2248 = vpop.f32.mrf.mxu0
    %2249 = vdwg.mxu0
    %2250 = vmatpush.bf16.msra.mxu0 %v1843
    %2251 = vmatpush.bf16.msra.mxu0 %v1836
    %2252 = vmatpush.bf16.msra.mxu0 %v1829
    %2253 = vmatpush.bf16.msra.mxu0 %v1822
    %2254 = vmatpush.bf16.msra.mxu0 %v1815
    %2255 = vmatpush.bf16.msra.mxu0 %v1808
    %2256 = vmatpush.bf16.msra.mxu0 %v1801
    %2257 = vmatpush.bf16.msra.mxu0 %v1794
    %2258 = vmatmul.bf16.gmra.mxu0 %v758
    %v2259 = vpop.f32.mrf.mxu0
    %v2260 = vadd.f32 %v2247, %v2259
    %v2261 = vpop.f32.mrf.mxu0
    %2262 = vdwg.mxu0
    %2263 = vmatpush.bf16.msra.mxu0 %v1899
    %2264 = vmatpush.bf16.msra.mxu0 %v1892
    %2265 = vmatpush.bf16.msra.mxu0 %v1885
    %2266 = vmatpush.bf16.msra.mxu0 %v1878
    %2267 = vmatpush.bf16.msra.mxu0 %v1871
    %2268 = vmatpush.bf16.msra.mxu0 %v1864
    %2269 = vmatpush.bf16.msra.mxu0 %v1857
    %2270 = vmatpush.bf16.msra.mxu0 %v1850
    %2271 = vmatmul.bf16.gmra.mxu0 %v759
    %v2272 = vpop.f32.mrf.mxu0
    %v2273 = vadd.f32 %v2260, %v2272
    %v2274 = vpop.f32.mrf.mxu0
    %2275 = vdwg.mxu0
    %2276 = vmatpush.bf16.msra.mxu0 %v1955
    %2277 = vmatpush.bf16.msra.mxu0 %v1948
    %2278 = vmatpush.bf16.msra.mxu0 %v1941
    %2279 = vmatpush.bf16.msra.mxu0 %v1934
    %2280 = vmatpush.bf16.msra.mxu0 %v1927
    %2281 = vmatpush.bf16.msra.mxu0 %v1920
    %2282 = vmatpush.bf16.msra.mxu0 %v1913
    %2283 = vmatpush.bf16.msra.mxu0 %v1906
    %2284 = vmatmul.bf16.gmra.mxu0 %v760
    %v2285 = vpop.f32.mrf.mxu0
    %v2286 = vadd.f32 %v2273, %v2285
    %v2287 = vpop.f32.mrf.mxu0
    %2288 = vdwg.mxu0
    %2289 = vmatpush.bf16.msra.mxu0 %v1788
    %2290 = vmatpush.bf16.msra.mxu0 %v1781
    %2291 = vmatpush.bf16.msra.mxu0 %v1774
    %2292 = vmatpush.bf16.msra.mxu0 %v1767
    %2293 = vmatpush.bf16.msra.mxu0 %v1760
    %2294 = vmatpush.bf16.msra.mxu0 %v1753
    %2295 = vmatpush.bf16.msra.mxu0 %v1746
    %2296 = vmatpush.bf16.msra.mxu0 %v1739
    %2297 = vmatmul.bf16.gmra.mxu0 %v757
    %v2298 = vpop.f32.mrf.mxu0
    %v2299 = vadd.f32 %v1021, %v2298
    %v2300 = vpop.f32.mrf.mxu0
    %2301 = vdwg.mxu0
    %2302 = vmatpush.bf16.msra.mxu0 %v1844
    %2303 = vmatpush.bf16.msra.mxu0 %v1837
    %2304 = vmatpush.bf16.msra.mxu0 %v1830
    %2305 = vmatpush.bf16.msra.mxu0 %v1823
    %2306 = vmatpush.bf16.msra.mxu0 %v1816
    %2307 = vmatpush.bf16.msra.mxu0 %v1809
    %2308 = vmatpush.bf16.msra.mxu0 %v1802
    %2309 = vmatpush.bf16.msra.mxu0 %v1795
    %2310 = vmatmul.bf16.gmra.mxu0 %v758
    %v2311 = vpop.f32.mrf.mxu0
    %v2312 = vadd.f32 %v2299, %v2311
    %v2313 = vpop.f32.mrf.mxu0
    %2314 = vdwg.mxu0
    %2315 = vmatpush.bf16.msra.mxu0 %v1900
    %2316 = vmatpush.bf16.msra.mxu0 %v1893
    %2317 = vmatpush.bf16.msra.mxu0 %v1886
    %2318 = vmatpush.bf16.msra.mxu0 %v1879
    %2319 = vmatpush.bf16.msra.mxu0 %v1872
    %2320 = vmatpush.bf16.msra.mxu0 %v1865
    %2321 = vmatpush.bf16.msra.mxu0 %v1858
    %2322 = vmatpush.bf16.msra.mxu0 %v1851
    %2323 = vmatmul.bf16.gmra.mxu0 %v759
    %v2324 = vpop.f32.mrf.mxu0
    %v2325 = vadd.f32 %v2312, %v2324
    %v2326 = vpop.f32.mrf.mxu0
    %2327 = vdwg.mxu0
    %2328 = vmatpush.bf16.msra.mxu0 %v1956
    %2329 = vmatpush.bf16.msra.mxu0 %v1949
    %2330 = vmatpush.bf16.msra.mxu0 %v1942
    %2331 = vmatpush.bf16.msra.mxu0 %v1935
    %2332 = vmatpush.bf16.msra.mxu0 %v1928
    %2333 = vmatpush.bf16.msra.mxu0 %v1921
    %2334 = vmatpush.bf16.msra.mxu0 %v1914
    %2335 = vmatpush.bf16.msra.mxu0 %v1907
    %2336 = vmatmul.bf16.gmra.mxu0 %v760
    %v2337 = vpop.f32.mrf.mxu0
    %v2338 = vadd.f32 %v2325, %v2337
    %v2339 = vpop.f32.mrf.mxu0
    %2340 = vdwg.mxu0
    %2341 = vmatpush.bf16.msra.mxu0 %v1789
    %2342 = vmatpush.bf16.msra.mxu0 %v1782
    %2343 = vmatpush.bf16.msra.mxu0 %v1775
    %2344 = vmatpush.bf16.msra.mxu0 %v1768
    %2345 = vmatpush.bf16.msra.mxu0 %v1761
    %2346 = vmatpush.bf16.msra.mxu0 %v1754
    %2347 = vmatpush.bf16.msra.mxu0 %v1747
    %2348 = vmatpush.bf16.msra.mxu0 %v1740
    %2349 = vmatmul.bf16.gmra.mxu0 %v757
    %v2350 = vpop.f32.mrf.mxu0
    %v2351 = vadd.f32 %v1022, %v2350
    %v2352 = vpop.f32.mrf.mxu0
    %2353 = vdwg.mxu0
    %2354 = vmatpush.bf16.msra.mxu0 %v1845
    %2355 = vmatpush.bf16.msra.mxu0 %v1838
    %2356 = vmatpush.bf16.msra.mxu0 %v1831
    %2357 = vmatpush.bf16.msra.mxu0 %v1824
    %2358 = vmatpush.bf16.msra.mxu0 %v1817
    %2359 = vmatpush.bf16.msra.mxu0 %v1810
    %2360 = vmatpush.bf16.msra.mxu0 %v1803
    %2361 = vmatpush.bf16.msra.mxu0 %v1796
    %2362 = vmatmul.bf16.gmra.mxu0 %v758
    %v2363 = vpop.f32.mrf.mxu0
    %v2364 = vadd.f32 %v2351, %v2363
    %v2365 = vpop.f32.mrf.mxu0
    %2366 = vdwg.mxu0
    %2367 = vmatpush.bf16.msra.mxu0 %v1901
    %2368 = vmatpush.bf16.msra.mxu0 %v1894
    %2369 = vmatpush.bf16.msra.mxu0 %v1887
    %2370 = vmatpush.bf16.msra.mxu0 %v1880
    %2371 = vmatpush.bf16.msra.mxu0 %v1873
    %2372 = vmatpush.bf16.msra.mxu0 %v1866
    %2373 = vmatpush.bf16.msra.mxu0 %v1859
    %2374 = vmatpush.bf16.msra.mxu0 %v1852
    %2375 = vmatmul.bf16.gmra.mxu0 %v759
    %v2376 = vpop.f32.mrf.mxu0
    %v2377 = vadd.f32 %v2364, %v2376
    %v2378 = vpop.f32.mrf.mxu0
    %2379 = vdwg.mxu0
    %2380 = vmatpush.bf16.msra.mxu0 %v1957
    %2381 = vmatpush.bf16.msra.mxu0 %v1950
    %2382 = vmatpush.bf16.msra.mxu0 %v1943
    %2383 = vmatpush.bf16.msra.mxu0 %v1936
    %2384 = vmatpush.bf16.msra.mxu0 %v1929
    %2385 = vmatpush.bf16.msra.mxu0 %v1922
    %2386 = vmatpush.bf16.msra.mxu0 %v1915
    %2387 = vmatpush.bf16.msra.mxu0 %v1908
    %2388 = vmatmul.bf16.gmra.mxu0 %v760
    %v2389 = vpop.f32.mrf.mxu0
    %v2390 = vadd.f32 %v2377, %v2389
    %v2391 = vpop.f32.mrf.mxu0
    %2392 = vdwg.mxu0
    %2393 = vmatpush.bf16.msra.mxu0 %v1790
    %2394 = vmatpush.bf16.msra.mxu0 %v1783
    %2395 = vmatpush.bf16.msra.mxu0 %v1776
    %2396 = vmatpush.bf16.msra.mxu0 %v1769
    %2397 = vmatpush.bf16.msra.mxu0 %v1762
    %2398 = vmatpush.bf16.msra.mxu0 %v1755
    %2399 = vmatpush.bf16.msra.mxu0 %v1748
    %2400 = vmatpush.bf16.msra.mxu0 %v1741
    %2401 = vmatmul.bf16.gmra.mxu0 %v757
    %v2402 = vpop.f32.mrf.mxu0
    %v2403 = vadd.f32 %v1023, %v2402
    %v2404 = vpop.f32.mrf.mxu0
    %2405 = vdwg.mxu0
    %2406 = vmatpush.bf16.msra.mxu0 %v1846
    %2407 = vmatpush.bf16.msra.mxu0 %v1839
    %2408 = vmatpush.bf16.msra.mxu0 %v1832
    %2409 = vmatpush.bf16.msra.mxu0 %v1825
    %2410 = vmatpush.bf16.msra.mxu0 %v1818
    %2411 = vmatpush.bf16.msra.mxu0 %v1811
    %2412 = vmatpush.bf16.msra.mxu0 %v1804
    %2413 = vmatpush.bf16.msra.mxu0 %v1797
    %2414 = vmatmul.bf16.gmra.mxu0 %v758
    %v2415 = vpop.f32.mrf.mxu0
    %v2416 = vadd.f32 %v2403, %v2415
    %v2417 = vpop.f32.mrf.mxu0
    %2418 = vdwg.mxu0
    %2419 = vmatpush.bf16.msra.mxu0 %v1902
    %2420 = vmatpush.bf16.msra.mxu0 %v1895
    %2421 = vmatpush.bf16.msra.mxu0 %v1888
    %2422 = vmatpush.bf16.msra.mxu0 %v1881
    %2423 = vmatpush.bf16.msra.mxu0 %v1874
    %2424 = vmatpush.bf16.msra.mxu0 %v1867
    %2425 = vmatpush.bf16.msra.mxu0 %v1860
    %2426 = vmatpush.bf16.msra.mxu0 %v1853
    %2427 = vmatmul.bf16.gmra.mxu0 %v759
    %v2428 = vpop.f32.mrf.mxu0
    %v2429 = vadd.f32 %v2416, %v2428
    %v2430 = vpop.f32.mrf.mxu0
    %2431 = vdwg.mxu0
    %2432 = vmatpush.bf16.msra.mxu0 %v1958
    %2433 = vmatpush.bf16.msra.mxu0 %v1951
    %2434 = vmatpush.bf16.msra.mxu0 %v1944
    %2435 = vmatpush.bf16.msra.mxu0 %v1937
    %2436 = vmatpush.bf16.msra.mxu0 %v1930
    %2437 = vmatpush.bf16.msra.mxu0 %v1923
    %2438 = vmatpush.bf16.msra.mxu0 %v1916
    %2439 = vmatpush.bf16.msra.mxu0 %v1909
    %2440 = vmatmul.bf16.gmra.mxu0 %v760
    %v2441 = vpop.f32.mrf.mxu0
    %v2442 = vadd.f32 %v2429, %v2441
    %v2443 = vpop.f32.mrf.mxu0
    %2444 = vdwg.mxu0
    %2445 = vmatpush.bf16.msra.mxu0 %v1791
    %2446 = vmatpush.bf16.msra.mxu0 %v1784
    %2447 = vmatpush.bf16.msra.mxu0 %v1777
    %2448 = vmatpush.bf16.msra.mxu0 %v1770
    %2449 = vmatpush.bf16.msra.mxu0 %v1763
    %2450 = vmatpush.bf16.msra.mxu0 %v1756
    %2451 = vmatpush.bf16.msra.mxu0 %v1749
    %2452 = vmatpush.bf16.msra.mxu0 %v1742
    %2453 = vmatmul.bf16.gmra.mxu0 %v757
    %v2454 = vpop.f32.mrf.mxu0
    %v2455 = vadd.f32 %v1024, %v2454
    %v2456 = vpop.f32.mrf.mxu0
    %2457 = vdwg.mxu0
    %2458 = vmatpush.bf16.msra.mxu0 %v1847
    %2459 = vmatpush.bf16.msra.mxu0 %v1840
    %2460 = vmatpush.bf16.msra.mxu0 %v1833
    %2461 = vmatpush.bf16.msra.mxu0 %v1826
    %2462 = vmatpush.bf16.msra.mxu0 %v1819
    %2463 = vmatpush.bf16.msra.mxu0 %v1812
    %2464 = vmatpush.bf16.msra.mxu0 %v1805
    %2465 = vmatpush.bf16.msra.mxu0 %v1798
    %2466 = vmatmul.bf16.gmra.mxu0 %v758
    %v2467 = vpop.f32.mrf.mxu0
    %v2468 = vadd.f32 %v2455, %v2467
    %v2469 = vpop.f32.mrf.mxu0
    %2470 = vdwg.mxu0
    %2471 = vmatpush.bf16.msra.mxu0 %v1903
    %2472 = vmatpush.bf16.msra.mxu0 %v1896
    %2473 = vmatpush.bf16.msra.mxu0 %v1889
    %2474 = vmatpush.bf16.msra.mxu0 %v1882
    %2475 = vmatpush.bf16.msra.mxu0 %v1875
    %2476 = vmatpush.bf16.msra.mxu0 %v1868
    %2477 = vmatpush.bf16.msra.mxu0 %v1861
    %2478 = vmatpush.bf16.msra.mxu0 %v1854
    %2479 = vmatmul.bf16.gmra.mxu0 %v759
    %v2480 = vpop.f32.mrf.mxu0
    %v2481 = vadd.f32 %v2468, %v2480
    %v2482 = vpop.f32.mrf.mxu0
    %2483 = vdwg.mxu0
    %2484 = vmatpush.bf16.msra.mxu0 %v1959
    %2485 = vmatpush.bf16.msra.mxu0 %v1952
    %2486 = vmatpush.bf16.msra.mxu0 %v1945
    %2487 = vmatpush.bf16.msra.mxu0 %v1938
    %2488 = vmatpush.bf16.msra.mxu0 %v1931
    %2489 = vmatpush.bf16.msra.mxu0 %v1924
    %2490 = vmatpush.bf16.msra.mxu0 %v1917
    %2491 = vmatpush.bf16.msra.mxu0 %v1910
    %2492 = vmatmul.bf16.gmra.mxu0 %v760
    %v2493 = vpop.f32.mrf.mxu0
    %v2494 = vadd.f32 %v2481, %v2493
    %v2495 = vpop.f32.mrf.mxu0
    %2496 = vdwg.mxu0
    %2497 = vmatpush.bf16.msra.mxu0 %v1792
    %2498 = vmatpush.bf16.msra.mxu0 %v1785
    %2499 = vmatpush.bf16.msra.mxu0 %v1778
    %2500 = vmatpush.bf16.msra.mxu0 %v1771
    %2501 = vmatpush.bf16.msra.mxu0 %v1764
    %2502 = vmatpush.bf16.msra.mxu0 %v1757
    %2503 = vmatpush.bf16.msra.mxu0 %v1750
    %2504 = vmatpush.bf16.msra.mxu0 %v1743
    %2505 = vmatmul.bf16.gmra.mxu0 %v757
    %v2506 = vpop.f32.mrf.mxu0
    %v2507 = vadd.f32 %v1025, %v2506
    %v2508 = vpop.f32.mrf.mxu0
    %2509 = vdwg.mxu0
    %2510 = vmatpush.bf16.msra.mxu0 %v1848
    %2511 = vmatpush.bf16.msra.mxu0 %v1841
    %2512 = vmatpush.bf16.msra.mxu0 %v1834
    %2513 = vmatpush.bf16.msra.mxu0 %v1827
    %2514 = vmatpush.bf16.msra.mxu0 %v1820
    %2515 = vmatpush.bf16.msra.mxu0 %v1813
    %2516 = vmatpush.bf16.msra.mxu0 %v1806
    %2517 = vmatpush.bf16.msra.mxu0 %v1799
    %2518 = vmatmul.bf16.gmra.mxu0 %v758
    %v2519 = vpop.f32.mrf.mxu0
    %v2520 = vadd.f32 %v2507, %v2519
    %v2521 = vpop.f32.mrf.mxu0
    %2522 = vdwg.mxu0
    %2523 = vmatpush.bf16.msra.mxu0 %v1904
    %2524 = vmatpush.bf16.msra.mxu0 %v1897
    %2525 = vmatpush.bf16.msra.mxu0 %v1890
    %2526 = vmatpush.bf16.msra.mxu0 %v1883
    %2527 = vmatpush.bf16.msra.mxu0 %v1876
    %2528 = vmatpush.bf16.msra.mxu0 %v1869
    %2529 = vmatpush.bf16.msra.mxu0 %v1862
    %2530 = vmatpush.bf16.msra.mxu0 %v1855
    %2531 = vmatmul.bf16.gmra.mxu0 %v759
    %v2532 = vpop.f32.mrf.mxu0
    %v2533 = vadd.f32 %v2520, %v2532
    %v2534 = vpop.f32.mrf.mxu0
    %2535 = vdwg.mxu0
    %2536 = vmatpush.bf16.msra.mxu0 %v1960
    %2537 = vmatpush.bf16.msra.mxu0 %v1953
    %2538 = vmatpush.bf16.msra.mxu0 %v1946
    %2539 = vmatpush.bf16.msra.mxu0 %v1939
    %2540 = vmatpush.bf16.msra.mxu0 %v1932
    %2541 = vmatpush.bf16.msra.mxu0 %v1925
    %2542 = vmatpush.bf16.msra.mxu0 %v1918
    %2543 = vmatpush.bf16.msra.mxu0 %v1911
    %2544 = vmatmul.bf16.gmra.mxu0 %v760
    %v2545 = vpop.f32.mrf.mxu0
    %v2546 = vadd.f32 %v2533, %v2545
    %v2547 = vpop.f32.mrf.mxu0
    %2548 = vdwg.mxu0
    %v2549 = vtanh.pop %v2234
    %v2550 = vtanh.pop %v2286
    %v2551 = vtanh.pop %v2338
    %v2552 = vtanh.pop %v2390
    %v2553 = vtanh.pop %v2442
    %v2554 = vtanh.pop %v2494
    %v2555 = vtanh.pop %v2546
    %v2556 = vpack.c.bf16 %v2550, %v2549
    %v2557 = vpack.c.bf16 %v2552, %v2551
    %v2558 = vpack.c.bf16 %v2554, %v2553
    %v2559 = vpack.c.bf16 %v2555, %v2555
    %2560 = vst [vmem:[#allocation3] sm:$0xff] %v2556
    %2561 = vst [vmem:[#allocation3 + $0x8] sm:$0xff] %v2557
    %2562 = vst [vmem:[#allocation3 + $0x10] sm:$0xff] %v2558
    %vm2563 = vcmask 125952
    %2564 = vst.msk [vmem:[#allocation3 + $0x18] sm:$0xf] %vm2563, %v2559
    // Predicated region
    $region38: #{tpu_custom_call.1} parent=1 // pred_check
      _
    $region39: #{tpu_custom_call.1} parent=1 // pred_check_branch
      %2566 = sbr.rel (0) target = $region41
    $region40: #{tpu_custom_call.1} parent=1 // pred_region
      %2568 = vsyncadd [#allocation4], 0
      %s2570 = sshll.u32 [#allocation3], 4
      %s2571 = int_to_ptr.vmem [resolvable:$true] %s2570
      %s2572 = sshll.u32 %s9, 4
      %s2573 = int_to_ptr.hbm [resolvable:$true] %s2572
      %2575 = dma.vmem_to_hbm [thread:$0]  %s2571, 448, %s2573, [#allocation4]
    $region41: #{tpu_custom_call.1} parent=1 // pred_fallthru
      _
    // Predicated region
    $region42: #{tpu_custom_call.1} parent=1 // pred_check
      _
    $region43: #{tpu_custom_call.1} parent=1 // pred_check_branch
      %2577 = sbr.rel (0) target = $region45
    $region44: #{tpu_custom_call.1} parent=1 // pred_region
      %2579 = dma.done [#allocation4], 448
    $region45: #{tpu_custom_call.1} parent=1 // pred_fallthru
      _
    %2580 = vsyncpa [#allocation4], 1

</llo_original>
